<compile_context>
chip_gen: v7x
topology: tpu7x:2x2x1
jax: 0.10.0
libtpu: 0.0.40
codegen_flags: <defaults>
</compile_context>

<pallas_src>
import jax
import jax.numpy as jnp
from jax.experimental import pallas as pl
from jax.experimental.pallas import tpu as pltpu


def _round_up(x, m):
    return ((x + m - 1) // m) * m


# ----------------------------------------------------------------------------- kernel
def _make_kernel(n_hlayer: int, leakiness: float, normalize_noise: int, d_noise_p: int):
    """Fused GeneratorLN forward kernel for a fixed architecture."""

    def kernel(a_ref, eps_ref, wmulv_ref, bmulv_ref, *rest):
        # rest = [w_h0, b_h0, ..., w_h{n_hlayer-1}, b_h{n_hlayer-1}, w_out, b_out, out_ref]
        out_ref = rest[-1]
        params = rest[:-1]

        # fused noise_mu|noise_logvar linear (bf16 MXU, f32 accumulation)
        a16 = a_ref[...].astype(jnp.bfloat16)
        mulv = jnp.dot(a16, wmulv_ref[...],
                       preferred_element_type=jnp.float32) + bmulv_ref[...]
        mu = mulv[:, :d_noise_p]
        logvar = mulv[:, d_noise_p:]

        # reparameterization: z = mu + eps * exp(0.5 * logvar)
        z = mu + eps_ref[...] * jnp.exp(0.5 * logvar)

        if normalize_noise:
            # F.normalize(z, dim=1, p=2): z / max(||z||_2, 1e-12)
            norm = jnp.sqrt(jnp.sum(z * z, axis=-1, keepdims=True))
            z = z / jnp.maximum(norm, 1e-12)

        h = z
        # hidden stack: Linear -> LeakyReLU (Dropout is identity in eval mode)
        for li in range(n_hlayer):
            w = params[2 * li][...]
            b = params[2 * li + 1][...]
            h = jnp.dot(h.astype(jnp.bfloat16), w,
                        preferred_element_type=jnp.float32) + b
            h = jnp.where(h > 0, h, leakiness * h)

        # final Linear(., 2048) -> ReLU
        w_out = params[2 * n_hlayer][...]
        b_out = params[2 * n_hlayer + 1][...]
        o = jnp.dot(h.astype(jnp.bfloat16), w_out,
                    preferred_element_type=jnp.float32) + b_out
        out_ref[...] = jnp.maximum(o, 0.0).astype(out_ref.dtype)

    return kernel


# ----------------------------------------------------------------------------- params
def init_params(key, n_attr, d_noise, n_hlayer, n_hunit, out_dim=2048):
    """Deterministic synthetic parameter init (stand-in for variable_init)."""

    def linear(k, fan_in, fan_out):
        kw, kb = jax.random.split(k)
        w = jax.random.normal(kw, (fan_in, fan_out), jnp.float32) * 0.02
        b = jax.random.normal(kb, (1, fan_out), jnp.float32) * 0.01
        return w, b

    keys = jax.random.split(key, 3 + max(n_hlayer, 0))
    params = {}
    params["noise_mu"] = linear(keys[0], n_attr, d_noise)
    params["noise_logvar"] = linear(keys[1], n_attr, d_noise)
    hidden = []
    in_dim = d_noise
    for li in range(n_hlayer):
        hidden.append(linear(keys[2 + li], in_dim, n_hunit))
        in_dim = n_hunit
    params["hidden"] = hidden
    params["out"] = linear(keys[-1], in_dim, out_dim)
    return params


def pack_params(params, n_attr, d_noise, n_hlayer, n_hunit, out_dim=2048, lane=128):
    """Pad feature dims to 128 lanes, fuse mu|logvar weights, cast weights to bf16."""
    d_noise_p = _round_up(d_noise, lane)
    n_hunit_p = _round_up(n_hunit, lane) if n_hlayer > 0 else d_noise_p

    def pad2(x, rows, cols):
        return jnp.pad(x, ((0, rows - x.shape[0]), (0, cols - x.shape[1])))

    wmu, bmu = params["noise_mu"]
    wlv, blv = params["noise_logvar"]
    wmulv = jnp.concatenate(
        [pad2(wmu, n_attr, d_noise_p), pad2(wlv, n_attr, d_noise_p)], axis=1
    ).astype(jnp.bfloat16)
    bmulv = jnp.concatenate(
        [pad2(bmu, 1, d_noise_p), pad2(blv, 1, d_noise_p)], axis=1
    ).astype(jnp.float32)

    flat = [wmulv, bmulv]
    in_dim_p = d_noise_p
    for (w, b) in params["hidden"]:
        flat.append(pad2(w, in_dim_p, n_hunit_p).astype(jnp.bfloat16))
        flat.append(pad2(b, 1, n_hunit_p).astype(jnp.float32))
        in_dim_p = n_hunit_p
    w, b = params["out"]
    flat.append(pad2(w, in_dim_p, out_dim).astype(jnp.bfloat16))
    flat.append(pad2(b, 1, out_dim).astype(jnp.float32))
    return flat, d_noise_p, n_hunit_p


# ----------------------------------------------------------------------------- wrapper
def generator_ln_forward(a, eps, params, *, n_attr, d_noise, n_hlayer, n_hunit,
                         leakiness=0.2, normalize_noise=0, out_dim=2048,
                         max_tile_b=512):
    B = a.shape[0]
    flat, d_noise_p, n_hunit_p = pack_params(
        params, n_attr, d_noise, n_hlayer, n_hunit, out_dim)

    # Batch tiling: biggest tile that stays well inside the v7x 32 MiB scoped budget.
    TILE_B = min(max_tile_b, _round_up(B, 8))
    B_p = _round_up(B, TILE_B)

    a_p = jnp.pad(a.astype(jnp.float32), ((0, B_p - B), (0, 0)))
    eps_p = jnp.pad(eps.astype(jnp.float32),
                    ((0, B_p - B), (0, d_noise_p - d_noise)))

    kernel = _make_kernel(n_hlayer, leakiness, normalize_noise, d_noise_p)

    def batch_spec(cols):
        return pl.BlockSpec((TILE_B, cols), lambda i: (i, 0))

    def resident_spec(arr):
        return pl.BlockSpec(tuple(arr.shape), lambda i: (0, 0))

    in_specs = ([batch_spec(a_p.shape[1]), batch_spec(d_noise_p)]
                + [resident_spec(x) for x in flat])
    out_specs = batch_spec(out_dim)

    # Advisory cost estimate for the XLA scheduler.
    flops = 2 * B_p * n_attr * (2 * d_noise_p)
    in_dim = d_noise_p
    for _ in range(n_hlayer):
        flops += 2 * B_p * in_dim * n_hunit_p
        in_dim = n_hunit_p
    flops += 2 * B_p * in_dim * out_dim
    bytes_accessed = (a_p.size + eps_p.size) * 4 + B_p * out_dim * 4
    bytes_accessed += sum(int(x.size) * x.dtype.itemsize for x in flat)
    cost = pl.CostEstimate(flops=int(flops),
                           transcendentals=int(B_p * d_noise_p),
                           bytes_accessed=int(bytes_accessed))

    out = pl.pallas_call(
        kernel,
        out_shape=jax.ShapeDtypeStruct((B_p, out_dim), jnp.float32),
        grid=(B_p // TILE_B,),
        in_specs=in_specs,
        out_specs=out_specs,
        compiler_params=pltpu.CompilerParams(
            dimension_semantics=("parallel",),
            vmem_limit_bytes=32 * 1024 * 1024,
        ),
        cost_estimate=cost,
    )(a_p, eps_p, *flat)
    return out[:B]


# ----------------------------------------------------------------------------- references
def reference_bf16(a_p, eps_p, flat, *, n_hlayer, leakiness, normalize_noise, d_noise_p):
    """Pure-JAX mirror of the kernel math (padded params, bf16 matmuls, f32 accum)."""
    wmulv, bmulv = flat[0], flat[1]
    mulv = jnp.dot(a_p.astype(jnp.bfloat16), wmulv,
                   preferred_element_type=jnp.float32) + bmulv
    mu, logvar = mulv[:, :d_noise_p], mulv[:, d_noise_p:]
    z = mu + eps_p * jnp.exp(0.5 * logvar)
    if normalize_noise:
        z = z / jnp.maximum(jnp.sqrt(jnp.sum(z * z, axis=-1, keepdims=True)), 1e-12)
    h = z
    rest = flat[2:]
    for li in range(n_hlayer):
        w, b = rest[2 * li], rest[2 * li + 1]
        h = jnp.dot(h.astype(jnp.bfloat16), w, preferred_element_type=jnp.float32) + b
        h = jnp.where(h > 0, h, leakiness * h)
    w_out, b_out = rest[2 * n_hlayer], rest[2 * n_hlayer + 1]
    return jnp.maximum(
        jnp.dot(h.astype(jnp.bfloat16), w_out, preferred_element_type=jnp.float32) + b_out,
        0.0)


def reference_f32(a, eps, params, *, n_hlayer, leakiness=0.2, normalize_noise=0):
    """Pure-f32 reference mirroring the PyTorch eval-mode forward."""
    w, b = params["noise_mu"]
    mu = a @ w + b
    w, b = params["noise_logvar"]
    logvar = a @ w + b
    z = mu + eps * jnp.exp(0.5 * logvar)
    if normalize_noise:
        z = z / jnp.maximum(jnp.sqrt(jnp.sum(z * z, axis=-1, keepdims=True)), 1e-12)
    h = z
    for (w, b) in params["hidden"]:
        h = h @ w + b
        h = jnp.where(h > 0, h, leakiness * h)
    w, b = params["out"]
    return jnp.maximum(h @ w + b, 0.0)


# ----------------------------------------------------------------------------- main
if __name__ == "__main__":
    # Small, deterministic configuration.
    B, n_attr, d_noise, n_hlayer, n_hunit = 8, 16, 32, 2, 64
    leakiness = 0.2
    normalize_noise = 0

    key = jax.random.PRNGKey(0)
    k_params, k_a, k_eps = jax.random.split(key, 3)

    params = init_params(k_params, n_attr, d_noise, n_hlayer, n_hunit)
    a = jax.random.normal(k_a, (B, n_attr), jnp.float32)
    eps = jax.random.normal(k_eps, (B, d_noise), jnp.float32)  # reparam noise

    out = generator_ln_forward(a, eps, params,
                               n_attr=n_attr, d_noise=d_noise,
                               n_hlayer=n_hlayer, n_hunit=n_hunit,
                               leakiness=leakiness,
                               normalize_noise=normalize_noise)
    out = jax.block_until_ready(out)
    assert out.shape == (B, 2048), out.shape

    # Tight check vs a reference that mirrors the kernel's bf16/padded math.
    flat, d_noise_p, _ = pack_params(params, n_attr, d_noise, n_hlayer, n_hunit)
    eps_p = jnp.pad(eps, ((0, 0), (0, d_noise_p - d_noise)))
    ref16 = reference_bf16(a, eps_p, flat, n_hlayer=n_hlayer, leakiness=leakiness,
                           normalize_noise=normalize_noise, d_noise_p=d_noise_p)
    assert jnp.allclose(out, ref16, atol=1e-3, rtol=1e-3), "mismatch vs bf16 reference"

    # Loose check vs the pure-f32 module semantics (bf16 weights => small drift).
    ref32 = reference_f32(a, eps, params, n_hlayer=n_hlayer, leakiness=leakiness,
                          normalize_noise=normalize_noise)
    assert jnp.allclose(out, ref32, atol=2e-2, rtol=2e-2), "mismatch vs f32 reference"

    print("KERNEL_OK")
</pallas_src>

<mosaic_0001>
module attributes {stable_mosaic.version = 11 : i64} {
  func.func @kernel(%arg0: i32, %arg1: memref<8x16xf32, #tpu.memory_space<vmem>>, %arg2: memref<8x128xf32, #tpu.memory_space<vmem>>, %arg3: memref<16x256xbf16, #tpu.memory_space<vmem>>, %arg4: memref<1x256xf32, #tpu.memory_space<vmem>>, %arg5: memref<128x128xbf16, #tpu.memory_space<vmem>>, %arg6: memref<1x128xf32, #tpu.memory_space<vmem>>, %arg7: memref<128x128xbf16, #tpu.memory_space<vmem>>, %arg8: memref<1x128xf32, #tpu.memory_space<vmem>>, %arg9: memref<128x2048xbf16, #tpu.memory_space<vmem>>, %arg10: memref<1x2048xf32, #tpu.memory_space<vmem>>, %arg11: memref<8x2048xf32, #tpu.memory_space<vmem>>) attributes {dimension_semantics = [#tpu.dimension_semantics<parallel>], iteration_bounds = array<i64: 1>, scalar_prefetch = 0 : i64, scratch_operands = 0 : i64, tpu.core_type = #tpu.core_type<tc>, window_params = [{transform_indices = @transform_0, window_bounds = array<i64: 8, 16>}, {transform_indices = @transform_1, window_bounds = array<i64: 8, 128>}, {pipeline_mode = #tpu.pipeline_mode<synchronous>, transform_indices = @transform_2, window_bounds = array<i64: 16, 256>}, {pipeline_mode = #tpu.pipeline_mode<synchronous>, transform_indices = @transform_3, window_bounds = array<i64: 1, 256>}, {pipeline_mode = #tpu.pipeline_mode<synchronous>, transform_indices = @transform_4, window_bounds = array<i64: 128, 128>}, {pipeline_mode = #tpu.pipeline_mode<synchronous>, transform_indices = @transform_5, window_bounds = array<i64: 1, 128>}, {pipeline_mode = #tpu.pipeline_mode<synchronous>, transform_indices = @transform_6, window_bounds = array<i64: 128, 128>}, {pipeline_mode = #tpu.pipeline_mode<synchronous>, transform_indices = @transform_7, window_bounds = array<i64: 1, 128>}, {pipeline_mode = #tpu.pipeline_mode<synchronous>, transform_indices = @transform_8, window_bounds = array<i64: 128, 2048>}, {pipeline_mode = #tpu.pipeline_mode<synchronous>, transform_indices = @transform_9, window_bounds = array<i64: 1, 2048>}, {transform_indices = @transform_10, window_bounds = array<i64: 8, 2048>}]} {
    %c0 = arith.constant 0 : index
    %c0_0 = arith.constant 0 : index
    %0 = vector.load %arg1[%c0, %c0_0] : memref<8x16xf32, #tpu.memory_space<vmem>>, vector<8x16xf32>
    %1 = arith.truncf %0 : vector<8x16xf32> to vector<8x16xbf16>
    %c0_1 = arith.constant 0 : index
    %c0_2 = arith.constant 0 : index
    %2 = vector.load %arg3[%c0_1, %c0_2] : memref<16x256xbf16, #tpu.memory_space<vmem>>, vector<16x256xbf16>
    %cst = arith.constant dense<0.000000e+00> : vector<8x256xf32>
    %3 = tpu.matmul %1, %2, %cst {dimension_numbers = #tpu.dot_dimension_numbers<[1], [0], [0], [1], [0, 0, 1, 1], [], []>} : vector<8x16xbf16>, vector<16x256xbf16>, vector<8x256xf32> -> vector<8x256xf32>
    %c0_3 = arith.constant 0 : index
    %c0_4 = arith.constant 0 : index
    %4 = vector.load %arg4[%c0_3, %c0_4] : memref<1x256xf32, #tpu.memory_space<vmem>>, vector<1x256xf32>
    %5 = vector.broadcast %4 : vector<1x256xf32> to vector<8x256xf32>
    %6 = arith.addf %3, %5 : vector<8x256xf32>
    %7 = vector.extract_strided_slice %6 {offsets = [0, 0], sizes = [8, 128], strides = [1, 1]} : vector<8x256xf32> to vector<8x128xf32>
    %8 = vector.extract_strided_slice %6 {offsets = [0, 128], sizes = [8, 128], strides = [1, 1]} : vector<8x256xf32> to vector<8x128xf32>
    %c0_5 = arith.constant 0 : index
    %c0_6 = arith.constant 0 : index
    %9 = vector.load %arg2[%c0_5, %c0_6] : memref<8x128xf32, #tpu.memory_space<vmem>>, vector<8x128xf32>
    %cst_7 = arith.constant 5.000000e-01 : f32
    %10 = vector.broadcast %cst_7 : f32 to vector<8x128xf32>
    %11 = arith.mulf %10, %8 : vector<8x128xf32>
    %12 = math.exp %11 : vector<8x128xf32>
    %13 = arith.mulf %9, %12 : vector<8x128xf32>
    %14 = arith.addf %7, %13 : vector<8x128xf32>
    %c0_8 = arith.constant 0 : index
    %c0_9 = arith.constant 0 : index
    %15 = vector.load %arg5[%c0_8, %c0_9] : memref<128x128xbf16, #tpu.memory_space<vmem>>, vector<128x128xbf16>
    %c0_10 = arith.constant 0 : index
    %c0_11 = arith.constant 0 : index
    %16 = vector.load %arg6[%c0_10, %c0_11] : memref<1x128xf32, #tpu.memory_space<vmem>>, vector<1x128xf32>
    %17 = arith.truncf %14 : vector<8x128xf32> to vector<8x128xbf16>
    %cst_12 = arith.constant dense<0.000000e+00> : vector<8x128xf32>
    %18 = tpu.matmul %17, %15, %cst_12 {dimension_numbers = #tpu.dot_dimension_numbers<[1], [0], [0], [1], [0, 0, 1, 1], [], []>} : vector<8x128xbf16>, vector<128x128xbf16>, vector<8x128xf32> -> vector<8x128xf32>
    %19 = vector.broadcast %16 : vector<1x128xf32> to vector<8x128xf32>
    %20 = arith.addf %18, %19 : vector<8x128xf32>
    %cst_13 = arith.constant 0.000000e+00 : f32
    %21 = vector.broadcast %cst_13 : f32 to vector<8x128xf32>
    %22 = arith.cmpf ogt, %20, %21 : vector<8x128xf32>
    %cst_14 = arith.constant 2.000000e-01 : f32
    %23 = vector.broadcast %cst_14 : f32 to vector<8x128xf32>
    %24 = arith.mulf %23, %20 : vector<8x128xf32>
    %25 = arith.select %22, %20, %24 : vector<8x128xi1>, vector<8x128xf32>
    %c0_15 = arith.constant 0 : index
    %c0_16 = arith.constant 0 : index
    %26 = vector.load %arg7[%c0_15, %c0_16] : memref<128x128xbf16, #tpu.memory_space<vmem>>, vector<128x128xbf16>
    %c0_17 = arith.constant 0 : index
    %c0_18 = arith.constant 0 : index
    %27 = vector.load %arg8[%c0_17, %c0_18] : memref<1x128xf32, #tpu.memory_space<vmem>>, vector<1x128xf32>
    %28 = arith.truncf %25 : vector<8x128xf32> to vector<8x128xbf16>
    %cst_19 = arith.constant dense<0.000000e+00> : vector<8x128xf32>
    %29 = tpu.matmul %28, %26, %cst_19 {dimension_numbers = #tpu.dot_dimension_numbers<[1], [0], [0], [1], [0, 0, 1, 1], [], []>} : vector<8x128xbf16>, vector<128x128xbf16>, vector<8x128xf32> -> vector<8x128xf32>
    %30 = vector.broadcast %27 : vector<1x128xf32> to vector<8x128xf32>
    %31 = arith.addf %29, %30 : vector<8x128xf32>
    %cst_20 = arith.constant 0.000000e+00 : f32
    %32 = vector.broadcast %cst_20 : f32 to vector<8x128xf32>
    %33 = arith.cmpf ogt, %31, %32 : vector<8x128xf32>
    %cst_21 = arith.constant 2.000000e-01 : f32
    %34 = vector.broadcast %cst_21 : f32 to vector<8x128xf32>
    %35 = arith.mulf %34, %31 : vector<8x128xf32>
    %36 = arith.select %33, %31, %35 : vector<8x128xi1>, vector<8x128xf32>
    %c0_22 = arith.constant 0 : index
    %c0_23 = arith.constant 0 : index
    %37 = vector.load %arg9[%c0_22, %c0_23] : memref<128x2048xbf16, #tpu.memory_space<vmem>>, vector<128x2048xbf16>
    %c0_24 = arith.constant 0 : index
    %c0_25 = arith.constant 0 : index
    %38 = vector.load %arg10[%c0_24, %c0_25] : memref<1x2048xf32, #tpu.memory_space<vmem>>, vector<1x2048xf32>
    %39 = arith.truncf %36 : vector<8x128xf32> to vector<8x128xbf16>
    %cst_26 = arith.constant dense<0.000000e+00> : vector<8x2048xf32>
    %40 = tpu.matmul %39, %37, %cst_26 {dimension_numbers = #tpu.dot_dimension_numbers<[1], [0], [0], [1], [0, 0, 1, 1], [], []>} : vector<8x128xbf16>, vector<128x2048xbf16>, vector<8x2048xf32> -> vector<8x2048xf32>
    %41 = vector.broadcast %38 : vector<1x2048xf32> to vector<8x2048xf32>
    %42 = arith.addf %40, %41 : vector<8x2048xf32>
    %cst_27 = arith.constant 0.000000e+00 : f32
    %43 = vector.broadcast %cst_27 : f32 to vector<8x2048xf32>
    %44 = arith.maximumf %42, %43 : vector<8x2048xf32>
    %c0_28 = arith.constant 0 : index
    %c0_29 = arith.constant 0 : index
    %45 = vector.load %arg11[%c0_28, %c0_29] : memref<8x2048xf32, #tpu.memory_space<vmem>>, vector<8x2048xf32>
    tpu.vector_store %arg11[%c0_28, %c0_29], %44 {strides = array<i32>} : memref<8x2048xf32, #tpu.memory_space<vmem>>, vector<8x2048xf32>,
    return
  }
  func.func @transform_0(%arg0: i32) -> (i32, i32) {
    %c0_i32 = arith.constant 0 : i32
    %c0_i32_0 = arith.constant 0 : i32
    return %arg0, %c0_i32 : i32, i32
  }
  func.func @transform_1(%arg0: i32) -> (i32, i32) {
    %c0_i32 = arith.constant 0 : i32
    %c0_i32_0 = arith.constant 0 : i32
    return %arg0, %c0_i32 : i32, i32
  }
  func.func @transform_2(%arg0: i32) -> (i32, i32) {
    %c0_i32 = arith.constant 0 : i32
    %c0_i32_0 = arith.constant 0 : i32
    %c0_i32_1 = arith.constant 0 : i32
    return %c0_i32, %c0_i32_0 : i32, i32
  }
  func.func @transform_3(%arg0: i32) -> (i32, i32) {
    %c0_i32 = arith.constant 0 : i32
    %c0_i32_0 = arith.constant 0 : i32
    %c0_i32_1 = arith.constant 0 : i32
    return %c0_i32, %c0_i32_0 : i32, i32
  }
  func.func @transform_4(%arg0: i32) -> (i32, i32) {
    %c0_i32 = arith.constant 0 : i32
    %c0_i32_0 = arith.constant 0 : i32
    %c0_i32_1 = arith.constant 0 : i32
    return %c0_i32, %c0_i32_0 : i32, i32
  }
  func.func @transform_5(%arg0: i32) -> (i32, i32) {
    %c0_i32 = arith.constant 0 : i32
    %c0_i32_0 = arith.constant 0 : i32
    %c0_i32_1 = arith.constant 0 : i32
    return %c0_i32, %c0_i32_0 : i32, i32
  }
  func.func @transform_6(%arg0: i32) -> (i32, i32) {
    %c0_i32 = arith.constant 0 : i32
    %c0_i32_0 = arith.constant 0 : i32
    %c0_i32_1 = arith.constant 0 : i32
    return %c0_i32, %c0_i32_0 : i32, i32
  }
  func.func @transform_7(%arg0: i32) -> (i32, i32) {
    %c0_i32 = arith.constant 0 : i32
    %c0_i32_0 = arith.constant 0 : i32
    %c0_i32_1 = arith.constant 0 : i32
    return %c0_i32, %c0_i32_0 : i32, i32
  }
  func.func @transform_8(%arg0: i32) -> (i32, i32) {
    %c0_i32 = arith.constant 0 : i32
    %c0_i32_0 = arith.constant 0 : i32
    %c0_i32_1 = arith.constant 0 : i32
    return %c0_i32, %c0_i32_0 : i32, i32
  }
  func.func @transform_9(%arg0: i32) -> (i32, i32) {
    %c0_i32 = arith.constant 0 : i32
    %c0_i32_0 = arith.constant 0 : i32
    %c0_i32_1 = arith.constant 0 : i32
    return %c0_i32, %c0_i32_0 : i32, i32
  }
  func.func @transform_10(%arg0: i32) -> (i32, i32) {
    %c0_i32 = arith.constant 0 : i32
    %c0_i32_0 = arith.constant 0 : i32
    return %arg0, %c0_i32 : i32, i32
  }
}

</mosaic_0001>

<llo_original>
// kernel: tpu_custom_call.1
$region0: #{tpu_custom_call.1}
  #allocation0 [shape = 'u32[]', space=smem, size = 0x4, offset = 0x4, fixed_abs, tag = 'smem constant byte address 0x4 - core index']
  #allocation1 [shape = 'u32[144,128]{1,0:T(1,128)}', space=vmem, size = 0x12000, scoped, tag = 'internal scratch']
  %s0 = inlined_call_operand.hbm [shape: f32[8,16], index: 0, kind: input, shape index: {}]
  %s1 = inlined_call_operand.hbm [shape: f32[8,128], index: 1, kind: input, shape index: {}]
  %s2 = inlined_call_operand.hbm [shape: bf16[16,256], index: 2, kind: input, shape index: {}]
  %s3 = inlined_call_operand.vmem [shape: f32[1,256], index: 3, kind: input, shape index: {}]
  %s4 = inlined_call_operand.hbm [shape: bf16[128,128], index: 4, kind: input, shape index: {}]
  %s5 = inlined_call_operand.vmem [shape: f32[1,128], index: 5, kind: input, shape index: {}]
  %s6 = inlined_call_operand.hbm [shape: bf16[128,128], index: 6, kind: input, shape index: {}]
  %s7 = inlined_call_operand.vmem [shape: f32[1,128], index: 7, kind: input, shape index: {}]
  %s8 = inlined_call_operand.hbm [shape: bf16[128,2048], index: 8, kind: input, shape index: {}]
  %s9 = inlined_call_operand.vmem [shape: f32[1,2048], index: 9, kind: input, shape index: {}]
  %s10 = inlined_call_operand.hbm [shape: f32[8,2048], index: 10, kind: output, shape index: {}]
  %s11 = sld [smem:[#allocation0]]
  $region74: #{tpu_custom_call.1} parent=0
    _
  %s13 = ssub.s32 1, %s11
  %s14 = scalar_select 0, %s13, %s11
  $region1: #{tpu_custom_call.1} parent=0
    #allocation2 [shape = 'u8[4096]{0}', space=vmem, size = 0x1000, scoped, tag = 'input window, operand 0, single buffered']
    #allocation3 [shape = 's32[1]{0}', space=sflag, size = 0x4, scoped, tag = 'scoped memory for tpu_custom_call.1']
    #allocation4 [shape = 's32[1]{0}', space=sflag, size = 0x4, scoped, tag = 'scoped memory for tpu_custom_call.1']
    #allocation5 [shape = 'u8[4096]{0}', space=vmem, size = 0x1000, scoped, tag = 'input window, operand 1, single buffered']
    #allocation6 [shape = 's32[1]{0}', space=sflag, size = 0x4, scoped, tag = 'scoped memory for tpu_custom_call.1']
    #allocation7 [shape = 'u8[8192]{0}', space=vmem, size = 0x2000, scoped, tag = 'input window, operand 2, single buffered']
    #allocation8 [shape = 'u8[32768]{0}', space=vmem, size = 0x8000, scoped, tag = 'input window, operand 4, single buffered']
    #allocation9 [shape = 's32[1]{0}', space=sflag, size = 0x4, scoped, tag = 'scoped memory for tpu_custom_call.1']
    #allocation10 [shape = 'u8[32768]{0}', space=vmem, size = 0x8000, scoped, tag = 'input window, operand 6, single buffered']
    #allocation11 [shape = 'u8[524288]{0}', space=vmem, size = 0x80000, scoped, tag = 'input window, operand 8, single buffered']
    #allocation12 [shape = 's32[1]{0}', space=sflag, size = 0x4, scoped, tag = 'scoped memory for tpu_custom_call.1']
    #allocation13 [shape = 'u8[65536]{0}', space=vmem, size = 0x10000, scoped, tag = 'output window, operand 0, single buffered']
    %15 = vsyncpa [#allocation3], 0
    %16 = vsyncpa [#allocation6], 0
    %17 = vsyncpa [#allocation9], 0
    %18 = vsyncpa [#allocation12], 0
    %19 = vsyncpa [#allocation4], 0
    // Predicated region
    $region2: #{tpu_custom_call.1} parent=1 // pred_check
      _
    $region3: #{tpu_custom_call.1} parent=1 // pred_check_branch
      %21 = sbr.rel (0) target = $region5
    $region4: #{tpu_custom_call.1} parent=1 // pred_region
      %s23 = ssub.s32 128, 128
      %24 = vsyncadd [#allocation3], %s23
      %s26 = sshll.u32 [#allocation2], 4
      %s27 = int_to_ptr.vmem [resolvable:$true] %s26
      %29 = dma.hbm_to_vmem [thread:$0]  %s0, 128, %s27, [#allocation3]
    $region5: #{tpu_custom_call.1} parent=1 // pred_fallthru
      _
    // Predicated region
    $region6: #{tpu_custom_call.1} parent=1 // pred_check
      _
    $region7: #{tpu_custom_call.1} parent=1 // pred_check_branch
      %31 = sbr.rel (0) target = $region9
    $region8: #{tpu_custom_call.1} parent=1 // pred_region
      %s33 = ssub.s32 128, 128
      %34 = vsyncadd [#allocation6], %s33
      %s36 = sshll.u32 [#allocation5], 4
      %s37 = int_to_ptr.vmem [resolvable:$true] %s36
      %39 = dma.hbm_to_vmem [thread:$0]  %s1, 128, %s37, [#allocation6]
    $region9: #{tpu_custom_call.1} parent=1 // pred_fallthru
      _
    // Predicated region
    $region10: #{tpu_custom_call.1} parent=1 // pred_check
      _
    $region11: #{tpu_custom_call.1} parent=1 // pred_check_branch
      %41 = sbr.rel (0) target = $region13
    $region12: #{tpu_custom_call.1} parent=1 // pred_region
      %s43 = ssub.s32 256, 256
      %44 = vsyncadd [#allocation6], %s43
      %s45 = sshll.u32 [#allocation7], 4
      %s46 = int_to_ptr.vmem [resolvable:$true] %s45
      %51 = dma.hbm_to_vmem [thread:$0]  %s2, 256, %s46, [#allocation6], 128, 128, 8
    $region13: #{tpu_custom_call.1} parent=1 // pred_fallthru
      _
    // Predicated region
    $region14: #{tpu_custom_call.1} parent=1 // pred_check
      _
    $region15: #{tpu_custom_call.1} parent=1 // pred_check_branch
      %53 = sbr.rel (0) target = $region17
    $region16: #{tpu_custom_call.1} parent=1 // pred_region
      _
    $region17: #{tpu_custom_call.1} parent=1 // pred_fallthru
      _
    // Predicated region
    $region18: #{tpu_custom_call.1} parent=1 // pred_check
      _
    $region19: #{tpu_custom_call.1} parent=1 // pred_check_branch
      %55 = sbr.rel (0) target = $region21
    $region20: #{tpu_custom_call.1} parent=1 // pred_region
      %s57 = ssub.s32 1024, 1024
      %58 = vsyncadd [#allocation9], %s57
      %s59 = sshll.u32 [#allocation8], 4
      %s60 = int_to_ptr.vmem [resolvable:$true] %s59
      %65 = dma.hbm_to_vmem [thread:$0]  %s4, 1024, %s60, [#allocation9], 64, 64, 4
    $region21: #{tpu_custom_call.1} parent=1 // pred_fallthru
      _
    // Predicated region
    $region22: #{tpu_custom_call.1} parent=1 // pred_check
      _
    $region23: #{tpu_custom_call.1} parent=1 // pred_check_branch
      %67 = sbr.rel (0) target = $region25
    $region24: #{tpu_custom_call.1} parent=1 // pred_region
      _
    $region25: #{tpu_custom_call.1} parent=1 // pred_fallthru
      _
    // Predicated region
    $region26: #{tpu_custom_call.1} parent=1 // pred_check
      _
    $region27: #{tpu_custom_call.1} parent=1 // pred_check_branch
      %69 = sbr.rel (0) target = $region29
    $region28: #{tpu_custom_call.1} parent=1 // pred_region
      %s71 = ssub.s32 1024, 1024
      %72 = vsyncadd [#allocation9], %s71
      %s73 = sshll.u32 [#allocation10], 4
      %s74 = int_to_ptr.vmem [resolvable:$true] %s73
      %79 = dma.hbm_to_vmem [thread:$0]  %s6, 1024, %s74, [#allocation9], 64, 64, 4
    $region29: #{tpu_custom_call.1} parent=1 // pred_fallthru
      _
    // Predicated region
    $region30: #{tpu_custom_call.1} parent=1 // pred_check
      _
    $region31: #{tpu_custom_call.1} parent=1 // pred_check_branch
      %81 = sbr.rel (0) target = $region33
    $region32: #{tpu_custom_call.1} parent=1 // pred_region
      _
    $region33: #{tpu_custom_call.1} parent=1 // pred_fallthru
      _
    // Predicated region
    $region34: #{tpu_custom_call.1} parent=1 // pred_check
      _
    $region35: #{tpu_custom_call.1} parent=1 // pred_check_branch
      %83 = sbr.rel (0) target = $region37
    $region36: #{tpu_custom_call.1} parent=1 // pred_region
      %s85 = ssub.s32 16384, 16384
      %86 = vsyncadd [#allocation12], %s85
      %s87 = sshll.u32 [#allocation11], 4
      %s88 = int_to_ptr.vmem [resolvable:$true] %s87
      %93 = dma.hbm_to_vmem [thread:$0]  %s8, 16384, %s88, [#allocation12], 1024, 1024, 64
    $region37: #{tpu_custom_call.1} parent=1 // pred_fallthru
      _
    // Predicated region
    $region38: #{tpu_custom_call.1} parent=1 // pred_check
      _
    $region39: #{tpu_custom_call.1} parent=1 // pred_check_branch
      %95 = sbr.rel (0) target = $region41
    $region40: #{tpu_custom_call.1} parent=1 // pred_region
      _
    $region41: #{tpu_custom_call.1} parent=1 // pred_fallthru
      _
    // Predicated region
    $region42: #{tpu_custom_call.1} parent=1 // pred_check
      _
    $region43: #{tpu_custom_call.1} parent=1 // pred_check_branch
      %97 = sbr.rel (0) target = $region45
    $region44: #{tpu_custom_call.1} parent=1 // pred_region
      %98 = dma.done [#allocation3], 128
    $region45: #{tpu_custom_call.1} parent=1 // pred_fallthru
      _
    // Predicated region
    $region46: #{tpu_custom_call.1} parent=1 // pred_check
      _
    $region47: #{tpu_custom_call.1} parent=1 // pred_check_branch
      %100 = sbr.rel (0) target = $region49
    $region48: #{tpu_custom_call.1} parent=1 // pred_region
      %101 = dma.done [#allocation6], 128
    $region49: #{tpu_custom_call.1} parent=1 // pred_fallthru
      _
    // Predicated region
    $region50: #{tpu_custom_call.1} parent=1 // pred_check
      _
    $region51: #{tpu_custom_call.1} parent=1 // pred_check_branch
      %103 = sbr.rel (0) target = $region53
    $region52: #{tpu_custom_call.1} parent=1 // pred_region
      %104 = dma.done [#allocation6], 256
    $region53: #{tpu_custom_call.1} parent=1 // pred_fallthru
      _
    // Predicated region
    $region54: #{tpu_custom_call.1} parent=1 // pred_check
      _
    $region55: #{tpu_custom_call.1} parent=1 // pred_check_branch
      %106 = sbr.rel (0) target = $region57
    $region56: #{tpu_custom_call.1} parent=1 // pred_region
      %107 = dma.done [#allocation9], 1024
    $region57: #{tpu_custom_call.1} parent=1 // pred_fallthru
      _
    // Predicated region
    $region58: #{tpu_custom_call.1} parent=1 // pred_check
      _
    $region59: #{tpu_custom_call.1} parent=1 // pred_check_branch
      %109 = sbr.rel (0) target = $region61
    $region60: #{tpu_custom_call.1} parent=1 // pred_region
      %110 = dma.done [#allocation9], 1024
    $region61: #{tpu_custom_call.1} parent=1 // pred_fallthru
      _
    // Predicated region
    $region62: #{tpu_custom_call.1} parent=1 // pred_check
      _
    $region63: #{tpu_custom_call.1} parent=1 // pred_check_branch
      %112 = sbr.rel (0) target = $region65
    $region64: #{tpu_custom_call.1} parent=1 // pred_region
      %113 = dma.done [#allocation12], 16384
    $region65: #{tpu_custom_call.1} parent=1 // pred_fallthru
      _
    %v115 = vld [vmem:[#allocation2] sm:$0xff]
    %v116 = vpack.c.bf16 %v115, %v115
    %v117 = vld [vmem:[#allocation7] sm:$0xff]
    %v118 = vld [vmem:[#allocation7 + $0x8] sm:$0xff]
    %v119 = vld [vmem:[%s3] sm:$0x3]
    %v121 = vlaneseq
    %v122 = vshrl.u32 %v121, 7
    %v123 = vsub.s32 0, %v122
    %v124 = vrot.slane %v119, %v123
    %v125 = vlaneseq
    %v126 = vshrl.u32 %v125, 7
    %v127 = vsub.s32 1, %v126
    %v128 = vrot.slane %v119, %v127
    %v133 = vunpack.c.l.b16 %v117
    %v134 = vunpack.c.h.b16 %v117
    %v135 = vunpack.c.l.b16 %v118
    %v136 = vunpack.c.h.b16 %v118
    %v137 = vpack.c.b16 %v135, %v133
    %v138 = vpack.c.b16 %v136, %v134
    %vm141 = vcmask 130048
    %v143 = vsel %vm141, %v116, 0
    %145 = vmatprep.subr.bf16.mxu0 %v138
    %146 = vmatpush1.bf16.msra.mxu0 %v137
    %147 = vmatprep.subr.bf16.mxu0 0
    %148 = vmatpush1.bf16.msra.mxu0 0
    %149 = vmatprep.subr.bf16.mxu0 0
    %150 = vmatpush1.bf16.msra.mxu0 0
    %151 = vmatprep.subr.bf16.mxu0 0
    %152 = vmatpush1.bf16.msra.mxu0 0
    %153 = vmatprep.subr.bf16.mxu0 0
    %154 = vmatpush1.bf16.msra.mxu0 0
    %155 = vmatprep.subr.bf16.mxu0 0
    %156 = vmatpush1.bf16.msra.mxu0 0
    %157 = vmatprep.subr.bf16.mxu0 0
    %158 = vmatpush1.bf16.msra.mxu0 0
    %159 = vmatprep.subr.bf16.mxu0 0
    %160 = vmatpush1.bf16.msra.mxu0 0
    %161 = vmatprep.subr.bf16.mxu0 0
    %162 = vmatpush1.bf16.msra.mxu0 0
    %163 = vmatprep.subr.bf16.mxu0 0
    %164 = vmatpush1.bf16.msra.mxu0 0
    %165 = vmatprep.subr.bf16.mxu0 0
    %166 = vmatpush1.bf16.msra.mxu0 0
    %167 = vmatprep.subr.bf16.mxu0 0
    %168 = vmatpush1.bf16.msra.mxu0 0
    %169 = vmatprep.subr.bf16.mxu0 0
    %170 = vmatpush1.bf16.msra.mxu0 0
    %171 = vmatprep.subr.bf16.mxu0 0
    %172 = vmatpush1.bf16.msra.mxu0 0
    %173 = vmatprep.subr.bf16.mxu0 0
    %174 = vmatpush1.bf16.msra.mxu0 0
    %175 = vmatprep.subr.bf16.mxu0 0
    %176 = vmatpush1.bf16.msra.mxu0 0
    %177 = vmatprep.mubr.bf16.mxu0 0
    %178 = vmatmul.mubr.bf16.gmra.mrb[0].mxu0 %v143
    %v179 = vpop.f32.mrb[0].mxu0
    %v180 = vadd.f32 %v124, %v179
    %v181 = vpop.f32.mrb[0].mxu0
    %v182 = vadd.f32 %v128, %v181
    %v183 = vpop.f32.mrb[0].mxu0
    %v184 = vpop.f32.mrb[0].mxu0
    %185 = vdwg.mxu0
    %v186 = vld [vmem:[#allocation5] sm:$0xff]
    %v187 = vmul.f32 %v182, 0.5
    %v188 = vmul.f32 %v187, 1.442695
    %v189 = vpow.pop %v188
    %v190 = vmul.f32 %v186, %v189
    %v191 = vadd.f32 %v180, %v190
    %v192 = vld [vmem:[#allocation8] sm:$0xf]
    %v193 = vld [vmem:[#allocation8 + $0x4] sm:$0xf]
    %v194 = vld [vmem:[#allocation8 + $0x8] sm:$0xf]
    %v195 = vld [vmem:[#allocation8 + $0xc] sm:$0xf]
    %v196 = vld [vmem:[#allocation8 + $0x10] sm:$0xf]
    %v197 = vld [vmem:[#allocation8 + $0x14] sm:$0xf]
    %v198 = vld [vmem:[#allocation8 + $0x18] sm:$0xf]
    %v199 = vld [vmem:[#allocation8 + $0x1c] sm:$0xf]
    %v200 = vld [vmem:[#allocation8 + $0x20] sm:$0xf]
    %v201 = vld [vmem:[#allocation8 + $0x24] sm:$0xf]
    %v202 = vld [vmem:[#allocation8 + $0x28] sm:$0xf]
    %v203 = vld [vmem:[#allocation8 + $0x2c] sm:$0xf]
    %v204 = vld [vmem:[#allocation8 + $0x30] sm:$0xf]
    %v205 = vld [vmem:[#allocation8 + $0x34] sm:$0xf]
    %v206 = vld [vmem:[#allocation8 + $0x38] sm:$0xf]
    %v207 = vld [vmem:[#allocation8 + $0x3c] sm:$0xf]
    %v208 = vld [vmem:[%s5] sm:$0x1]
    %v209 = vpack.c.bf16 %v191, %v191
    %v211 = vlaneseq
    %v212 = vshrl.u32 %v211, 7
    %v213 = vsub.s32 0, %v212
    %v214 = vrot.slane %v208, %v213
    %v232 = vunpack.c.l.b16 %v192
    %v233 = vunpack.c.l.b16 %v193
    %v234 = vunpack.c.l.b16 %v194
    %v235 = vunpack.c.l.b16 %v195
    %v236 = vunpack.c.l.b16 %v196
    %v237 = vunpack.c.l.b16 %v197
    %v238 = vunpack.c.l.b16 %v198
    %v239 = vunpack.c.l.b16 %v199
    %v240 = vunpack.c.l.b16 %v200
    %v241 = vunpack.c.l.b16 %v201
    %v242 = vunpack.c.l.b16 %v202
    %v243 = vunpack.c.l.b16 %v203
    %v244 = vunpack.c.l.b16 %v204
    %v245 = vunpack.c.l.b16 %v205
    %v246 = vunpack.c.l.b16 %v206
    %v247 = vunpack.c.l.b16 %v207
    %v248 = vpack.c.b16 %v233, %v232
    %v249 = vpack.c.b16 %v235, %v234
    %v250 = vpack.c.b16 %v237, %v236
    %v251 = vpack.c.b16 %v239, %v238
    %v252 = vpack.c.b16 %v241, %v240
    %v253 = vpack.c.b16 %v243, %v242
    %v254 = vpack.c.b16 %v245, %v244
    %v255 = vpack.c.b16 %v247, %v246
    %264 = vmatprep.subr.bf16.mxu0 0
    %265 = vmatpush1.bf16.msra.mxu0 %v248
    %266 = vmatprep.subr.bf16.mxu0 0
    %267 = vmatpush1.bf16.msra.mxu0 %v249
    %268 = vmatprep.subr.bf16.mxu0 0
    %269 = vmatpush1.bf16.msra.mxu0 %v250
    %270 = vmatprep.subr.bf16.mxu0 0
    %271 = vmatpush1.bf16.msra.mxu0 %v251
    %272 = vmatprep.subr.bf16.mxu0 0
    %273 = vmatpush1.bf16.msra.mxu0 %v252
    %274 = vmatprep.subr.bf16.mxu0 0
    %275 = vmatpush1.bf16.msra.mxu0 %v253
    %276 = vmatprep.subr.bf16.mxu0 0
    %277 = vmatpush1.bf16.msra.mxu0 %v254
    %278 = vmatprep.subr.bf16.mxu0 0
    %279 = vmatpush1.bf16.msra.mxu0 %v255
    %280 = vmatprep.subr.bf16.mxu0 0
    %281 = vmatpush1.bf16.msra.mxu0 0
    %282 = vmatprep.subr.bf16.mxu0 0
    %283 = vmatpush1.bf16.msra.mxu0 0
    %284 = vmatprep.subr.bf16.mxu0 0
    %285 = vmatpush1.bf16.msra.mxu0 0
    %286 = vmatprep.subr.bf16.mxu0 0
    %287 = vmatpush1.bf16.msra.mxu0 0
    %288 = vmatprep.subr.bf16.mxu0 0
    %289 = vmatpush1.bf16.msra.mxu0 0
    %290 = vmatprep.subr.bf16.mxu0 0
    %291 = vmatpush1.bf16.msra.mxu0 0
    %292 = vmatprep.subr.bf16.mxu0 0
    %293 = vmatpush1.bf16.msra.mxu0 0
    %294 = vmatprep.subr.bf16.mxu0 0
    %295 = vmatpush1.bf16.msra.mxu0 0
    %296 = vmatprep.mubr.bf16.mxu0 0
    %297 = vmatmul.mubr.bf16.gmra.mrb[0].mxu0 %v209
    %v298 = vpop.f32.mrb[0].mxu0
    %v299 = vadd.f32 %v214, %v298
    %v300 = vpop.f32.mrb[0].mxu0
    %v301 = vpop.f32.mrb[0].mxu0
    %v302 = vpop.f32.mrb[0].mxu0
    %303 = vdwg.mxu0
    %vm304 = vcmp.gt.f32.partialorder %v299, 0.0
    %v305 = vmul.f32 %v299, 0.2
    %v306 = vsel %vm304, %v299, %v305
    %v307 = vld [vmem:[#allocation10] sm:$0xf]
    %v308 = vld [vmem:[#allocation10 + $0x4] sm:$0xf]
    %v309 = vld [vmem:[#allocation10 + $0x8] sm:$0xf]
    %v310 = vld [vmem:[#allocation10 + $0xc] sm:$0xf]
    %v311 = vld [vmem:[#allocation10 + $0x10] sm:$0xf]
    %v312 = vld [vmem:[#allocation10 + $0x14] sm:$0xf]
    %v313 = vld [vmem:[#allocation10 + $0x18] sm:$0xf]
    %v314 = vld [vmem:[#allocation10 + $0x1c] sm:$0xf]
    %v315 = vld [vmem:[#allocation10 + $0x20] sm:$0xf]
    %v316 = vld [vmem:[#allocation10 + $0x24] sm:$0xf]
    %v317 = vld [vmem:[#allocation10 + $0x28] sm:$0xf]
    %v318 = vld [vmem:[#allocation10 + $0x2c] sm:$0xf]
    %v319 = vld [vmem:[#allocation10 + $0x30] sm:$0xf]
    %v320 = vld [vmem:[#allocation10 + $0x34] sm:$0xf]
    %v321 = vld [vmem:[#allocation10 + $0x38] sm:$0xf]
    %v322 = vld [vmem:[#allocation10 + $0x3c] sm:$0xf]
    %v323 = vld [vmem:[%s7] sm:$0x1]
    %v324 = vpack.c.bf16 %v306, %v306
    %v326 = vlaneseq
    %v327 = vshrl.u32 %v326, 7
    %v328 = vsub.s32 0, %v327
    %v329 = vrot.slane %v323, %v328
    %v347 = vunpack.c.l.b16 %v307
    %v348 = vunpack.c.l.b16 %v308
    %v349 = vunpack.c.l.b16 %v309
    %v350 = vunpack.c.l.b16 %v310
    %v351 = vunpack.c.l.b16 %v311
    %v352 = vunpack.c.l.b16 %v312
    %v353 = vunpack.c.l.b16 %v313
    %v354 = vunpack.c.l.b16 %v314
    %v355 = vunpack.c.l.b16 %v315
    %v356 = vunpack.c.l.b16 %v316
    %v357 = vunpack.c.l.b16 %v317
    %v358 = vunpack.c.l.b16 %v318
    %v359 = vunpack.c.l.b16 %v319
    %v360 = vunpack.c.l.b16 %v320
    %v361 = vunpack.c.l.b16 %v321
    %v362 = vunpack.c.l.b16 %v322
    %v363 = vpack.c.b16 %v348, %v347
    %v364 = vpack.c.b16 %v350, %v349
    %v365 = vpack.c.b16 %v352, %v351
    %v366 = vpack.c.b16 %v354, %v353
    %v367 = vpack.c.b16 %v356, %v355
    %v368 = vpack.c.b16 %v358, %v357
    %v369 = vpack.c.b16 %v360, %v359
    %v370 = vpack.c.b16 %v362, %v361
    %379 = vmatprep.subr.bf16.mxu0 0
    %380 = vmatpush1.bf16.msra.mxu0 %v363
    %381 = vmatprep.subr.bf16.mxu0 0
    %382 = vmatpush1.bf16.msra.mxu0 %v364
    %383 = vmatprep.subr.bf16.mxu0 0
    %384 = vmatpush1.bf16.msra.mxu0 %v365
    %385 = vmatprep.subr.bf16.mxu0 0
    %386 = vmatpush1.bf16.msra.mxu0 %v366
    %387 = vmatprep.subr.bf16.mxu0 0
    %388 = vmatpush1.bf16.msra.mxu0 %v367
    %389 = vmatprep.subr.bf16.mxu0 0
    %390 = vmatpush1.bf16.msra.mxu0 %v368
    %391 = vmatprep.subr.bf16.mxu0 0
    %392 = vmatpush1.bf16.msra.mxu0 %v369
    %393 = vmatprep.subr.bf16.mxu0 0
    %394 = vmatpush1.bf16.msra.mxu0 %v370
    %395 = vmatprep.subr.bf16.mxu0 0
    %396 = vmatpush1.bf16.msra.mxu0 0
    %397 = vmatprep.subr.bf16.mxu0 0
    %398 = vmatpush1.bf16.msra.mxu0 0
    %399 = vmatprep.subr.bf16.mxu0 0
    %400 = vmatpush1.bf16.msra.mxu0 0
    %401 = vmatprep.subr.bf16.mxu0 0
    %402 = vmatpush1.bf16.msra.mxu0 0
    %403 = vmatprep.subr.bf16.mxu0 0
    %404 = vmatpush1.bf16.msra.mxu0 0
    %405 = vmatprep.subr.bf16.mxu0 0
    %406 = vmatpush1.bf16.msra.mxu0 0
    %407 = vmatprep.subr.bf16.mxu0 0
    %408 = vmatpush1.bf16.msra.mxu0 0
    %409 = vmatprep.subr.bf16.mxu0 0
    %410 = vmatpush1.bf16.msra.mxu0 0
    %411 = vmatprep.mubr.bf16.mxu0 0
    %412 = vmatmul.mubr.bf16.gmra.mrb[0].mxu0 %v324
    %v413 = vpop.f32.mrb[0].mxu0
    %v414 = vadd.f32 %v329, %v413
    %v415 = vpop.f32.mrb[0].mxu0
    %v416 = vpop.f32.mrb[0].mxu0
    %v417 = vpop.f32.mrb[0].mxu0
    %418 = vdwg.mxu0
    %vm419 = vcmp.gt.f32.partialorder %v414, 0.0
    %v420 = vmul.f32 %v414, 0.2
    %v421 = vsel %vm419, %v414, %v420
    %v422 = vld [vmem:[#allocation11] sm:$0xff]
    %v423 = vld [vmem:[#allocation11 + $0x8] sm:$0xff]
    %v424 = vld [vmem:[#allocation11 + $0x10] sm:$0xff]
    %v425 = vld [vmem:[#allocation11 + $0x18] sm:$0xff]
    %v426 = vld [vmem:[#allocation11 + $0x20] sm:$0xff]
    %v427 = vld [vmem:[#allocation11 + $0x28] sm:$0xff]
    %v428 = vld [vmem:[#allocation11 + $0x30] sm:$0xff]
    %v429 = vld [vmem:[#allocation11 + $0x38] sm:$0xff]
    %v430 = vld [vmem:[#allocation11 + $0x40] sm:$0xff]
    %v431 = vld [vmem:[#allocation11 + $0x48] sm:$0xff]
    %v432 = vld [vmem:[#allocation11 + $0x50] sm:$0xff]
    %v433 = vld [vmem:[#allocation11 + $0x58] sm:$0xff]
    %v434 = vld [vmem:[#allocation11 + $0x60] sm:$0xff]
    %v435 = vld [vmem:[#allocation11 + $0x68] sm:$0xff]
    %v436 = vld [vmem:[#allocation11 + $0x70] sm:$0xff]
    %v437 = vld [vmem:[#allocation11 + $0x78] sm:$0xff]
    %v438 = vld [vmem:[#allocation11 + $0x80] sm:$0xff]
    %v439 = vld [vmem:[#allocation11 + $0x88] sm:$0xff]
    %v440 = vld [vmem:[#allocation11 + $0x90] sm:$0xff]
    %v441 = vld [vmem:[#allocation11 + $0x98] sm:$0xff]
    %v442 = vld [vmem:[#allocation11 + $0xa0] sm:$0xff]
    %v443 = vld [vmem:[#allocation11 + $0xa8] sm:$0xff]
    %v444 = vld [vmem:[#allocation11 + $0xb0] sm:$0xff]
    %v445 = vld [vmem:[#allocation11 + $0xb8] sm:$0xff]
    %v446 = vld [vmem:[#allocation11 + $0xc0] sm:$0xff]
    %v447 = vld [vmem:[#allocation11 + $0xc8] sm:$0xff]
    %v448 = vld [vmem:[#allocation11 + $0xd0] sm:$0xff]
    %v449 = vld [vmem:[#allocation11 + $0xd8] sm:$0xff]
    %v450 = vld [vmem:[#allocation11 + $0xe0] sm:$0xff]
    %v451 = vld [vmem:[#allocation11 + $0xe8] sm:$0xff]
    %v452 = vld [vmem:[#allocation11 + $0xf0] sm:$0xff]
    %v453 = vld [vmem:[#allocation11 + $0xf8] sm:$0xff]
    %v454 = vld [vmem:[#allocation11 + $0x100] sm:$0xff]
    %v455 = vld [vmem:[#allocation11 + $0x108] sm:$0xff]
    %v456 = vld [vmem:[#allocation11 + $0x110] sm:$0xff]
    %v457 = vld [vmem:[#allocation11 + $0x118] sm:$0xff]
    %v458 = vld [vmem:[#allocation11 + $0x120] sm:$0xff]
    %v459 = vld [vmem:[#allocation11 + $0x128] sm:$0xff]
    %v460 = vld [vmem:[#allocation11 + $0x130] sm:$0xff]
    %v461 = vld [vmem:[#allocation11 + $0x138] sm:$0xff]
    %v462 = vld [vmem:[#allocation11 + $0x140] sm:$0xff]
    %v463 = vld [vmem:[#allocation11 + $0x148] sm:$0xff]
    %v464 = vld [vmem:[#allocation11 + $0x150] sm:$0xff]
    %v465 = vld [vmem:[#allocation11 + $0x158] sm:$0xff]
    %v466 = vld [vmem:[#allocation11 + $0x160] sm:$0xff]
    %v467 = vld [vmem:[#allocation11 + $0x168] sm:$0xff]
    %v468 = vld [vmem:[#allocation11 + $0x170] sm:$0xff]
    %v469 = vld [vmem:[#allocation11 + $0x178] sm:$0xff]
    %v470 = vld [vmem:[#allocation11 + $0x180] sm:$0xff]
    %v471 = vld [vmem:[#allocation11 + $0x188] sm:$0xff]
    %v472 = vld [vmem:[#allocation11 + $0x190] sm:$0xff]
    %v473 = vld [vmem:[#allocation11 + $0x198] sm:$0xff]
    %v474 = vld [vmem:[#allocation11 + $0x1a0] sm:$0xff]
    %v475 = vld [vmem:[#allocation11 + $0x1a8] sm:$0xff]
    %v476 = vld [vmem:[#allocation11 + $0x1b0] sm:$0xff]
    %v477 = vld [vmem:[#allocation11 + $0x1b8] sm:$0xff]
    %v478 = vld [vmem:[#allocation11 + $0x1c0] sm:$0xff]
    %v479 = vld [vmem:[#allocation11 + $0x1c8] sm:$0xff]
    %v480 = vld [vmem:[#allocation11 + $0x1d0] sm:$0xff]
    %v481 = vld [vmem:[#allocation11 + $0x1d8] sm:$0xff]
    %v482 = vld [vmem:[#allocation11 + $0x1e0] sm:$0xff]
    %v483 = vld [vmem:[#allocation11 + $0x1e8] sm:$0xff]
    %v484 = vld [vmem:[#allocation11 + $0x1f0] sm:$0xff]
    %v485 = vld [vmem:[#allocation11 + $0x1f8] sm:$0xff]
    %v486 = vld [vmem:[#allocation11 + $0x200] sm:$0xff]
    %v487 = vld [vmem:[#allocation11 + $0x208] sm:$0xff]
    %v488 = vld [vmem:[#allocation11 + $0x210] sm:$0xff]
    %v489 = vld [vmem:[#allocation11 + $0x218] sm:$0xff]
    %v490 = vld [vmem:[#allocation11 + $0x220] sm:$0xff]
    %v491 = vld [vmem:[#allocation11 + $0x228] sm:$0xff]
    %v492 = vld [vmem:[#allocation11 + $0x230] sm:$0xff]
    %v493 = vld [vmem:[#allocation11 + $0x238] sm:$0xff]
    %v494 = vld [vmem:[#allocation11 + $0x240] sm:$0xff]
    %v495 = vld [vmem:[#allocation11 + $0x248] sm:$0xff]
    %v496 = vld [vmem:[#allocation11 + $0x250] sm:$0xff]
    %v497 = vld [vmem:[#allocation11 + $0x258] sm:$0xff]
    %v498 = vld [vmem:[#allocation11 + $0x260] sm:$0xff]
    %v499 = vld [vmem:[#allocation11 + $0x268] sm:$0xff]
    %v500 = vld [vmem:[#allocation11 + $0x270] sm:$0xff]
    %v501 = vld [vmem:[#allocation11 + $0x278] sm:$0xff]
    %v502 = vld [vmem:[#allocation11 + $0x280] sm:$0xff]
    %v503 = vld [vmem:[#allocation11 + $0x288] sm:$0xff]
    %v504 = vld [vmem:[#allocation11 + $0x290] sm:$0xff]
    %v505 = vld [vmem:[#allocation11 + $0x298] sm:$0xff]
    %v506 = vld [vmem:[#allocation11 + $0x2a0] sm:$0xff]
    %v507 = vld [vmem:[#allocation11 + $0x2a8] sm:$0xff]
    %v508 = vld [vmem:[#allocation11 + $0x2b0] sm:$0xff]
    %v509 = vld [vmem:[#allocation11 + $0x2b8] sm:$0xff]
    %v510 = vld [vmem:[#allocation11 + $0x2c0] sm:$0xff]
    %v511 = vld [vmem:[#allocation11 + $0x2c8] sm:$0xff]
    %v512 = vld [vmem:[#allocation11 + $0x2d0] sm:$0xff]
    %v513 = vld [vmem:[#allocation11 + $0x2d8] sm:$0xff]
    %v514 = vld [vmem:[#allocation11 + $0x2e0] sm:$0xff]
    %v515 = vld [vmem:[#allocation11 + $0x2e8] sm:$0xff]
    %v516 = vld [vmem:[#allocation11 + $0x2f0] sm:$0xff]
    %v517 = vld [vmem:[#allocation11 + $0x2f8] sm:$0xff]
    %v518 = vld [vmem:[#allocation11 + $0x300] sm:$0xff]
    %v519 = vld [vmem:[#allocation11 + $0x308] sm:$0xff]
    %v520 = vld [vmem:[#allocation11 + $0x310] sm:$0xff]
    %v521 = vld [vmem:[#allocation11 + $0x318] sm:$0xff]
    %v522 = vld [vmem:[#allocation11 + $0x320] sm:$0xff]
    %v523 = vld [vmem:[#allocation11 + $0x328] sm:$0xff]
    %v524 = vld [vmem:[#allocation11 + $0x330] sm:$0xff]
    %v525 = vld [vmem:[#allocation11 + $0x338] sm:$0xff]
    %v526 = vld [vmem:[#allocation11 + $0x340] sm:$0xff]
    %v527 = vld [vmem:[#allocation11 + $0x348] sm:$0xff]
    %v528 = vld [vmem:[#allocation11 + $0x350] sm:$0xff]
    %v529 = vld [vmem:[#allocation11 + $0x358] sm:$0xff]
    %v530 = vld [vmem:[#allocation11 + $0x360] sm:$0xff]
    %v531 = vld [vmem:[#allocation11 + $0x368] sm:$0xff]
    %v532 = vld [vmem:[#allocation11 + $0x370] sm:$0xff]
    %v533 = vld [vmem:[#allocation11 + $0x378] sm:$0xff]
    %v534 = vld [vmem:[#allocation11 + $0x380] sm:$0xff]
    %v535 = vld [vmem:[#allocation11 + $0x388] sm:$0xff]
    %v536 = vld [vmem:[#allocation11 + $0x390] sm:$0xff]
    %v537 = vld [vmem:[#allocation11 + $0x398] sm:$0xff]
    %v538 = vld [vmem:[#allocation11 + $0x3a0] sm:$0xff]
    %v539 = vld [vmem:[#allocation11 + $0x3a8] sm:$0xff]
    %v540 = vld [vmem:[#allocation11 + $0x3b0] sm:$0xff]
    %v541 = vld [vmem:[#allocation11 + $0x3b8] sm:$0xff]
    %v542 = vld [vmem:[#allocation11 + $0x3c0] sm:$0xff]
    %v543 = vld [vmem:[#allocation11 + $0x3c8] sm:$0xff]
    %v544 = vld [vmem:[#allocation11 + $0x3d0] sm:$0xff]
    %v545 = vld [vmem:[#allocation11 + $0x3d8] sm:$0xff]
    %v546 = vld [vmem:[#allocation11 + $0x3e0] sm:$0xff]
    %v547 = vld [vmem:[#allocation11 + $0x3e8] sm:$0xff]
    %v548 = vld [vmem:[#allocation11 + $0x3f0] sm:$0xff]
    %v549 = vld [vmem:[#allocation11 + $0x3f8] sm:$0xff]
    %v550 = vld [vmem:[%s9] sm:$0xff]
    %v551 = vld [vmem:[%s9 + $0x8] sm:$0xff]
    %v552 = vpack.c.bf16 %v421, %v421
    %v555 = vlaneseq
    %v556 = vshrl.u32 %v555, 7
    %v557 = vsub.s32 0, %v556
    %v558 = vrot.slane %v550, %v557
    %v559 = vlaneseq
    %v560 = vshrl.u32 %v559, 7
    %v561 = vsub.s32 1, %v560
    %v562 = vrot.slane %v550, %v561
    %v563 = vlaneseq
    %v564 = vshrl.u32 %v563, 7
    %v565 = vsub.s32 2, %v564
    %v566 = vrot.slane %v550, %v565
    %v567 = vlaneseq
    %v568 = vshrl.u32 %v567, 7
    %v569 = vsub.s32 3, %v568
    %v570 = vrot.slane %v550, %v569
    %v571 = vlaneseq
    %v572 = vshrl.u32 %v571, 7
    %v573 = vsub.s32 4, %v572
    %v574 = vrot.slane %v550, %v573
    %v575 = vlaneseq
    %v576 = vshrl.u32 %v575, 7
    %v577 = vsub.s32 5, %v576
    %v578 = vrot.slane %v550, %v577
    %v579 = vlaneseq
    %v580 = vshrl.u32 %v579, 7
    %v581 = vsub.s32 6, %v580
    %v582 = vrot.slane %v550, %v581
    %v583 = vlaneseq
    %v584 = vshrl.u32 %v583, 7
    %v585 = vsub.s32 7, %v584
    %v586 = vrot.slane %v550, %v585
    %v587 = vlaneseq
    %v588 = vshrl.u32 %v587, 7
    %v589 = vsub.s32 0, %v588
    %v590 = vrot.slane %v551, %v589
    %v591 = vlaneseq
    %v592 = vshrl.u32 %v591, 7
    %v593 = vsub.s32 1, %v592
    %v594 = vrot.slane %v551, %v593
    %v595 = vlaneseq
    %v596 = vshrl.u32 %v595, 7
    %v597 = vsub.s32 2, %v596
    %v598 = vrot.slane %v551, %v597
    %v599 = vlaneseq
    %v600 = vshrl.u32 %v599, 7
    %v601 = vsub.s32 3, %v600
    %v602 = vrot.slane %v551, %v601
    %v603 = vlaneseq
    %v604 = vshrl.u32 %v603, 7
    %v605 = vsub.s32 4, %v604
    %v606 = vrot.slane %v551, %v605
    %v607 = vlaneseq
    %v608 = vshrl.u32 %v607, 7
    %v609 = vsub.s32 5, %v608
    %v610 = vrot.slane %v551, %v609
    %v611 = vlaneseq
    %v612 = vshrl.u32 %v611, 7
    %v613 = vsub.s32 6, %v612
    %v614 = vrot.slane %v551, %v613
    %v615 = vlaneseq
    %v616 = vshrl.u32 %v615, 7
    %v617 = vsub.s32 7, %v616
    %v618 = vrot.slane %v551, %v617
    %v763 = vunpack.c.l.b16 %v422
    %v764 = vunpack.c.h.b16 %v422
    %v765 = vunpack.c.l.b16 %v423
    %v766 = vunpack.c.h.b16 %v423
    %v767 = vunpack.c.l.b16 %v424
    %v768 = vunpack.c.h.b16 %v424
    %v769 = vunpack.c.l.b16 %v425
    %v770 = vunpack.c.h.b16 %v425
    %v771 = vunpack.c.l.b16 %v426
    %v772 = vunpack.c.h.b16 %v426
    %v773 = vunpack.c.l.b16 %v427
    %v774 = vunpack.c.h.b16 %v427
    %v775 = vunpack.c.l.b16 %v428
    %v776 = vunpack.c.h.b16 %v428
    %v777 = vunpack.c.l.b16 %v429
    %v778 = vunpack.c.h.b16 %v429
    %v779 = vunpack.c.l.b16 %v430
    %v780 = vunpack.c.h.b16 %v430
    %v781 = vunpack.c.l.b16 %v431
    %v782 = vunpack.c.h.b16 %v431
    %v783 = vunpack.c.l.b16 %v432
    %v784 = vunpack.c.h.b16 %v432
    %v785 = vunpack.c.l.b16 %v433
    %v786 = vunpack.c.h.b16 %v433
    %v787 = vunpack.c.l.b16 %v434
    %v788 = vunpack.c.h.b16 %v434
    %v789 = vunpack.c.l.b16 %v435
    %v790 = vunpack.c.h.b16 %v435
    %v791 = vunpack.c.l.b16 %v436
    %v792 = vunpack.c.h.b16 %v436
    %v793 = vunpack.c.l.b16 %v437
    %v794 = vunpack.c.h.b16 %v437
    %v795 = vunpack.c.l.b16 %v438
    %v796 = vunpack.c.h.b16 %v438
    %v797 = vunpack.c.l.b16 %v439
    %v798 = vunpack.c.h.b16 %v439
    %v799 = vunpack.c.l.b16 %v440
    %v800 = vunpack.c.h.b16 %v440
    %v801 = vunpack.c.l.b16 %v441
    %v802 = vunpack.c.h.b16 %v441
    %v803 = vunpack.c.l.b16 %v442
    %v804 = vunpack.c.h.b16 %v442
    %v805 = vunpack.c.l.b16 %v443
    %v806 = vunpack.c.h.b16 %v443
    %v807 = vunpack.c.l.b16 %v444
    %v808 = vunpack.c.h.b16 %v444
    %v809 = vunpack.c.l.b16 %v445
    %v810 = vunpack.c.h.b16 %v445
    %v811 = vunpack.c.l.b16 %v446
    %v812 = vunpack.c.h.b16 %v446
    %v813 = vunpack.c.l.b16 %v447
    %v814 = vunpack.c.h.b16 %v447
    %v815 = vunpack.c.l.b16 %v448
    %v816 = vunpack.c.h.b16 %v448
    %v817 = vunpack.c.l.b16 %v449
    %v818 = vunpack.c.h.b16 %v449
    %v819 = vunpack.c.l.b16 %v450
    %v820 = vunpack.c.h.b16 %v450
    %v821 = vunpack.c.l.b16 %v451
    %v822 = vunpack.c.h.b16 %v451
    %v823 = vunpack.c.l.b16 %v452
    %v824 = vunpack.c.h.b16 %v452
    %v825 = vunpack.c.l.b16 %v453
    %v826 = vunpack.c.h.b16 %v453
    %v827 = vunpack.c.l.b16 %v454
    %v828 = vunpack.c.h.b16 %v454
    %v829 = vunpack.c.l.b16 %v455
    %v830 = vunpack.c.h.b16 %v455
    %v831 = vunpack.c.l.b16 %v456
    %v832 = vunpack.c.h.b16 %v456
    %v833 = vunpack.c.l.b16 %v457
    %v834 = vunpack.c.h.b16 %v457
    %v835 = vunpack.c.l.b16 %v458
    %v836 = vunpack.c.h.b16 %v458
    %v837 = vunpack.c.l.b16 %v459
    %v838 = vunpack.c.h.b16 %v459
    %v839 = vunpack.c.l.b16 %v460
    %v840 = vunpack.c.h.b16 %v460
    %v841 = vunpack.c.l.b16 %v461
    %v842 = vunpack.c.h.b16 %v461
    %v843 = vunpack.c.l.b16 %v462
    %v844 = vunpack.c.h.b16 %v462
    %v845 = vunpack.c.l.b16 %v463
    %v846 = vunpack.c.h.b16 %v463
    %v847 = vunpack.c.l.b16 %v464
    %v848 = vunpack.c.h.b16 %v464
    %v849 = vunpack.c.l.b16 %v465
    %v850 = vunpack.c.h.b16 %v465
    %v851 = vunpack.c.l.b16 %v466
    %v852 = vunpack.c.h.b16 %v466
    %v853 = vunpack.c.l.b16 %v467
    %v854 = vunpack.c.h.b16 %v467
    %v855 = vunpack.c.l.b16 %v468
    %v856 = vunpack.c.h.b16 %v468
    %v857 = vunpack.c.l.b16 %v469
    %v858 = vunpack.c.h.b16 %v469
    %v859 = vunpack.c.l.b16 %v470
    %v860 = vunpack.c.h.b16 %v470
    %v861 = vunpack.c.l.b16 %v471
    %v862 = vunpack.c.h.b16 %v471
    %v863 = vunpack.c.l.b16 %v472
    %v864 = vunpack.c.h.b16 %v472
    %v865 = vunpack.c.l.b16 %v473
    %v866 = vunpack.c.h.b16 %v473
    %v867 = vunpack.c.l.b16 %v474
    %v868 = vunpack.c.h.b16 %v474
    %v869 = vunpack.c.l.b16 %v475
    %v870 = vunpack.c.h.b16 %v475
    %v871 = vunpack.c.l.b16 %v476
    %v872 = vunpack.c.h.b16 %v476
    %v873 = vunpack.c.l.b16 %v477
    %v874 = vunpack.c.h.b16 %v477
    %v875 = vunpack.c.l.b16 %v478
    %v876 = vunpack.c.h.b16 %v478
    %v877 = vunpack.c.l.b16 %v479
    %v878 = vunpack.c.h.b16 %v479
    %v879 = vunpack.c.l.b16 %v480
    %v880 = vunpack.c.h.b16 %v480
    %v881 = vunpack.c.l.b16 %v481
    %v882 = vunpack.c.h.b16 %v481
    %v883 = vunpack.c.l.b16 %v482
    %v884 = vunpack.c.h.b16 %v482
    %v885 = vunpack.c.l.b16 %v483
    %v886 = vunpack.c.h.b16 %v483
    %v887 = vunpack.c.l.b16 %v484
    %v888 = vunpack.c.h.b16 %v484
    %v889 = vunpack.c.l.b16 %v485
    %v890 = vunpack.c.h.b16 %v485
    %v891 = vunpack.c.l.b16 %v486
    %v892 = vunpack.c.h.b16 %v486
    %v893 = vunpack.c.l.b16 %v487
    %v894 = vunpack.c.h.b16 %v487
    %v895 = vunpack.c.l.b16 %v488
    %v896 = vunpack.c.h.b16 %v488
    %v897 = vunpack.c.l.b16 %v489
    %v898 = vunpack.c.h.b16 %v489
    %v899 = vunpack.c.l.b16 %v490
    %v900 = vunpack.c.h.b16 %v490
    %v901 = vunpack.c.l.b16 %v491
    %v902 = vunpack.c.h.b16 %v491
    %v903 = vunpack.c.l.b16 %v492
    %v904 = vunpack.c.h.b16 %v492
    %v905 = vunpack.c.l.b16 %v493
    %v906 = vunpack.c.h.b16 %v493
    %v907 = vunpack.c.l.b16 %v494
    %v908 = vunpack.c.h.b16 %v494
    %v909 = vunpack.c.l.b16 %v495
    %v910 = vunpack.c.h.b16 %v495
    %v911 = vunpack.c.l.b16 %v496
    %v912 = vunpack.c.h.b16 %v496
    %v913 = vunpack.c.l.b16 %v497
    %v914 = vunpack.c.h.b16 %v497
    %v915 = vunpack.c.l.b16 %v498
    %v916 = vunpack.c.h.b16 %v498
    %v917 = vunpack.c.l.b16 %v499
    %v918 = vunpack.c.h.b16 %v499
    %v919 = vunpack.c.l.b16 %v500
    %v920 = vunpack.c.h.b16 %v500
    %v921 = vunpack.c.l.b16 %v501
    %v922 = vunpack.c.h.b16 %v501
    %v923 = vunpack.c.l.b16 %v502
    %v924 = vunpack.c.h.b16 %v502
    %v925 = vunpack.c.l.b16 %v503
    %v926 = vunpack.c.h.b16 %v503
    %v927 = vunpack.c.l.b16 %v504
    %v928 = vunpack.c.h.b16 %v504
    %v929 = vunpack.c.l.b16 %v505
    %v930 = vunpack.c.h.b16 %v505
    %v931 = vunpack.c.l.b16 %v506
    %v932 = vunpack.c.h.b16 %v506
    %v933 = vunpack.c.l.b16 %v507
    %v934 = vunpack.c.h.b16 %v507
    %v935 = vunpack.c.l.b16 %v508
    %v936 = vunpack.c.h.b16 %v508
    %v937 = vunpack.c.l.b16 %v509
    %v938 = vunpack.c.h.b16 %v509
    %v939 = vunpack.c.l.b16 %v510
    %v940 = vunpack.c.h.b16 %v510
    %v941 = vunpack.c.l.b16 %v511
    %v942 = vunpack.c.h.b16 %v511
    %v943 = vunpack.c.l.b16 %v512
    %v944 = vunpack.c.h.b16 %v512
    %v945 = vunpack.c.l.b16 %v513
    %v946 = vunpack.c.h.b16 %v513
    %v947 = vunpack.c.l.b16 %v514
    %v948 = vunpack.c.h.b16 %v514
    %v949 = vunpack.c.l.b16 %v515
    %v950 = vunpack.c.h.b16 %v515
    %v951 = vunpack.c.l.b16 %v516
    %v952 = vunpack.c.h.b16 %v516
    %v953 = vunpack.c.l.b16 %v517
    %v954 = vunpack.c.h.b16 %v517
    %v955 = vunpack.c.l.b16 %v518
    %v956 = vunpack.c.h.b16 %v518
    %v957 = vunpack.c.l.b16 %v519
    %v958 = vunpack.c.h.b16 %v519
    %v959 = vunpack.c.l.b16 %v520
    %v960 = vunpack.c.h.b16 %v520
    %v961 = vunpack.c.l.b16 %v521
    %v962 = vunpack.c.h.b16 %v521
    %v963 = vunpack.c.l.b16 %v522
    %v964 = vunpack.c.h.b16 %v522
    %v965 = vunpack.c.l.b16 %v523
    %v966 = vunpack.c.h.b16 %v523
    %v967 = vunpack.c.l.b16 %v524
    %v968 = vunpack.c.h.b16 %v524
    %v969 = vunpack.c.l.b16 %v525
    %v970 = vunpack.c.h.b16 %v525
    %v971 = vunpack.c.l.b16 %v526
    %v972 = vunpack.c.h.b16 %v526
    %v973 = vunpack.c.l.b16 %v527
    %v974 = vunpack.c.h.b16 %v527
    %v975 = vunpack.c.l.b16 %v528
    %v976 = vunpack.c.h.b16 %v528
    %v977 = vunpack.c.l.b16 %v529
    %v978 = vunpack.c.h.b16 %v529
    %v979 = vunpack.c.l.b16 %v530
    %v980 = vunpack.c.h.b16 %v530
    %v981 = vunpack.c.l.b16 %v531
    %v982 = vunpack.c.h.b16 %v531
    %v983 = vunpack.c.l.b16 %v532
    %v984 = vunpack.c.h.b16 %v532
    %v985 = vunpack.c.l.b16 %v533
    %v986 = vunpack.c.h.b16 %v533
    %v987 = vunpack.c.l.b16 %v534
    %v988 = vunpack.c.h.b16 %v534
    %v989 = vunpack.c.l.b16 %v535
    %v990 = vunpack.c.h.b16 %v535
    %v991 = vunpack.c.l.b16 %v536
    %v992 = vunpack.c.h.b16 %v536
    %v993 = vunpack.c.l.b16 %v537
    %v994 = vunpack.c.h.b16 %v537
    %v995 = vunpack.c.l.b16 %v538
    %v996 = vunpack.c.h.b16 %v538
    %v997 = vunpack.c.l.b16 %v539
    %v998 = vunpack.c.h.b16 %v539
    %v999 = vunpack.c.l.b16 %v540
    %v1000 = vunpack.c.h.b16 %v540
    %v1001 = vunpack.c.l.b16 %v541
    %v1002 = vunpack.c.h.b16 %v541
    %v1003 = vunpack.c.l.b16 %v542
    %v1004 = vunpack.c.h.b16 %v542
    %v1005 = vunpack.c.l.b16 %v543
    %v1006 = vunpack.c.h.b16 %v543
    %v1007 = vunpack.c.l.b16 %v544
    %v1008 = vunpack.c.h.b16 %v544
    %v1009 = vunpack.c.l.b16 %v545
    %v1010 = vunpack.c.h.b16 %v545
    %v1011 = vunpack.c.l.b16 %v546
    %v1012 = vunpack.c.h.b16 %v546
    %v1013 = vunpack.c.l.b16 %v547
    %v1014 = vunpack.c.h.b16 %v547
    %v1015 = vunpack.c.l.b16 %v548
    %v1016 = vunpack.c.h.b16 %v548
    %v1017 = vunpack.c.l.b16 %v549
    %v1018 = vunpack.c.h.b16 %v549
    %v1019 = vpack.c.b16 %v779, %v763
    %v1020 = vpack.c.b16 %v780, %v764
    %v1021 = vpack.c.b16 %v781, %v765
    %v1022 = vpack.c.b16 %v782, %v766
    %v1023 = vpack.c.b16 %v783, %v767
    %v1024 = vpack.c.b16 %v784, %v768
    %v1025 = vpack.c.b16 %v785, %v769
    %v1026 = vpack.c.b16 %v786, %v770
    %v1027 = vpack.c.b16 %v787, %v771
    %v1028 = vpack.c.b16 %v788, %v772
    %v1029 = vpack.c.b16 %v789, %v773
    %v1030 = vpack.c.b16 %v790, %v774
    %v1031 = vpack.c.b16 %v791, %v775
    %v1032 = vpack.c.b16 %v792, %v776
    %v1033 = vpack.c.b16 %v793, %v777
    %v1034 = vpack.c.b16 %v794, %v778
    %v1035 = vpack.c.b16 %v811, %v795
    %v1036 = vpack.c.b16 %v812, %v796
    %v1037 = vpack.c.b16 %v813, %v797
    %v1038 = vpack.c.b16 %v814, %v798
    %v1039 = vpack.c.b16 %v815, %v799
    %v1040 = vpack.c.b16 %v816, %v800
    %v1041 = vpack.c.b16 %v817, %v801
    %v1042 = vpack.c.b16 %v818, %v802
    %v1043 = vpack.c.b16 %v819, %v803
    %v1044 = vpack.c.b16 %v820, %v804
    %v1045 = vpack.c.b16 %v821, %v805
    %v1046 = vpack.c.b16 %v822, %v806
    %v1047 = vpack.c.b16 %v823, %v807
    %v1048 = vpack.c.b16 %v824, %v808
    %v1049 = vpack.c.b16 %v825, %v809
    %v1050 = vpack.c.b16 %v826, %v810
    %v1051 = vpack.c.b16 %v843, %v827
    %v1052 = vpack.c.b16 %v844, %v828
    %v1053 = vpack.c.b16 %v845, %v829
    %v1054 = vpack.c.b16 %v846, %v830
    %v1055 = vpack.c.b16 %v847, %v831
    %v1056 = vpack.c.b16 %v848, %v832
    %v1057 = vpack.c.b16 %v849, %v833
    %v1058 = vpack.c.b16 %v850, %v834
    %v1059 = vpack.c.b16 %v851, %v835
    %v1060 = vpack.c.b16 %v852, %v836
    %v1061 = vpack.c.b16 %v853, %v837
    %v1062 = vpack.c.b16 %v854, %v838
    %v1063 = vpack.c.b16 %v855, %v839
    %v1064 = vpack.c.b16 %v856, %v840
    %v1065 = vpack.c.b16 %v857, %v841
    %v1066 = vpack.c.b16 %v858, %v842
    %v1067 = vpack.c.b16 %v875, %v859
    %v1068 = vpack.c.b16 %v876, %v860
    %v1069 = vpack.c.b16 %v877, %v861
    %v1070 = vpack.c.b16 %v878, %v862
    %v1071 = vpack.c.b16 %v879, %v863
    %v1072 = vpack.c.b16 %v880, %v864
    %v1073 = vpack.c.b16 %v881, %v865
    %v1074 = vpack.c.b16 %v882, %v866
    %v1075 = vpack.c.b16 %v883, %v867
    %v1076 = vpack.c.b16 %v884, %v868
    %v1077 = vpack.c.b16 %v885, %v869
    %v1078 = vpack.c.b16 %v886, %v870
    %v1079 = vpack.c.b16 %v887, %v871
    %v1080 = vpack.c.b16 %v888, %v872
    %v1081 = vpack.c.b16 %v889, %v873
    %v1082 = vpack.c.b16 %v890, %v874
    %v1083 = vpack.c.b16 %v907, %v891
    %v1084 = vpack.c.b16 %v908, %v892
    %v1085 = vpack.c.b16 %v909, %v893
    %v1086 = vpack.c.b16 %v910, %v894
    %v1087 = vpack.c.b16 %v911, %v895
    %v1088 = vpack.c.b16 %v912, %v896
    %v1089 = vpack.c.b16 %v913, %v897
    %v1090 = vpack.c.b16 %v914, %v898
    %v1091 = vpack.c.b16 %v915, %v899
    %v1092 = vpack.c.b16 %v916, %v900
    %v1093 = vpack.c.b16 %v917, %v901
    %v1094 = vpack.c.b16 %v918, %v902
    %v1095 = vpack.c.b16 %v919, %v903
    %v1096 = vpack.c.b16 %v920, %v904
    %v1097 = vpack.c.b16 %v921, %v905
    %v1098 = vpack.c.b16 %v922, %v906
    %v1099 = vpack.c.b16 %v939, %v923
    %v1100 = vpack.c.b16 %v940, %v924
    %v1101 = vpack.c.b16 %v941, %v925
    %v1102 = vpack.c.b16 %v942, %v926
    %v1103 = vpack.c.b16 %v943, %v927
    %v1104 = vpack.c.b16 %v944, %v928
    %v1105 = vpack.c.b16 %v945, %v929
    %v1106 = vpack.c.b16 %v946, %v930
    %v1107 = vpack.c.b16 %v947, %v931
    %v1108 = vpack.c.b16 %v948, %v932
    %v1109 = vpack.c.b16 %v949, %v933
    %v1110 = vpack.c.b16 %v950, %v934
    %v1111 = vpack.c.b16 %v951, %v935
    %v1112 = vpack.c.b16 %v952, %v936
    %v1113 = vpack.c.b16 %v953, %v937
    %v1114 = vpack.c.b16 %v954, %v938
    %v1115 = vpack.c.b16 %v971, %v955
    %v1116 = vpack.c.b16 %v972, %v956
    %v1117 = vpack.c.b16 %v973, %v957
    %v1118 = vpack.c.b16 %v974, %v958
    %v1119 = vpack.c.b16 %v975, %v959
    %v1120 = vpack.c.b16 %v976, %v960
    %v1121 = vpack.c.b16 %v977, %v961
    %v1122 = vpack.c.b16 %v978, %v962
    %v1123 = vpack.c.b16 %v979, %v963
    %v1124 = vpack.c.b16 %v980, %v964
    %v1125 = vpack.c.b16 %v981, %v965
    %v1126 = vpack.c.b16 %v982, %v966
    %v1127 = vpack.c.b16 %v983, %v967
    %v1128 = vpack.c.b16 %v984, %v968
    %v1129 = vpack.c.b16 %v985, %v969
    %v1130 = vpack.c.b16 %v986, %v970
    %v1131 = vpack.c.b16 %v1003, %v987
    %v1132 = vpack.c.b16 %v1004, %v988
    %v1133 = vpack.c.b16 %v1005, %v989
    %v1134 = vpack.c.b16 %v1006, %v990
    %v1135 = vpack.c.b16 %v1007, %v991
    %v1136 = vpack.c.b16 %v1008, %v992
    %v1137 = vpack.c.b16 %v1009, %v993
    %v1138 = vpack.c.b16 %v1010, %v994
    %v1139 = vpack.c.b16 %v1011, %v995
    %v1140 = vpack.c.b16 %v1012, %v996
    %v1141 = vpack.c.b16 %v1013, %v997
    %v1142 = vpack.c.b16 %v1014, %v998
    %v1143 = vpack.c.b16 %v1015, %v999
    %v1144 = vpack.c.b16 %v1016, %v1000
    %v1145 = vpack.c.b16 %v1017, %v1001
    %v1146 = vpack.c.b16 %v1018, %v1002
    %1275 = vmatprep.subr.bf16.mxu0 %v1020
    %1276 = vmatpush1.bf16.msra.mxu0 %v1019
    %1277 = vmatprep.subr.bf16.mxu0 %v1036
    %1278 = vmatpush1.bf16.msra.mxu0 %v1035
    %1279 = vmatprep.subr.bf16.mxu0 %v1052
    %1280 = vmatpush1.bf16.msra.mxu0 %v1051
    %1281 = vmatprep.subr.bf16.mxu0 %v1068
    %1282 = vmatpush1.bf16.msra.mxu0 %v1067
    %1283 = vmatprep.subr.bf16.mxu0 %v1084
    %1284 = vmatpush1.bf16.msra.mxu0 %v1083
    %1285 = vmatprep.subr.bf16.mxu0 %v1100
    %1286 = vmatpush1.bf16.msra.mxu0 %v1099
    %1287 = vmatprep.subr.bf16.mxu0 %v1116
    %1288 = vmatpush1.bf16.msra.mxu0 %v1115
    %1289 = vmatprep.subr.bf16.mxu0 %v1132
    %1290 = vmatpush1.bf16.msra.mxu0 %v1131
    %1291 = vmatprep.subr.bf16.mxu0 0
    %1292 = vmatpush1.bf16.msra.mxu0 0
    %1293 = vmatprep.subr.bf16.mxu0 0
    %1294 = vmatpush1.bf16.msra.mxu0 0
    %1295 = vmatprep.subr.bf16.mxu0 0
    %1296 = vmatpush1.bf16.msra.mxu0 0
    %1297 = vmatprep.subr.bf16.mxu0 0
    %1298 = vmatpush1.bf16.msra.mxu0 0
    %1299 = vmatprep.subr.bf16.mxu0 0
    %1300 = vmatpush1.bf16.msra.mxu0 0
    %1301 = vmatprep.subr.bf16.mxu0 0
    %1302 = vmatpush1.bf16.msra.mxu0 0
    %1303 = vmatprep.subr.bf16.mxu0 0
    %1304 = vmatpush1.bf16.msra.mxu0 0
    %1305 = vmatprep.subr.bf16.mxu0 0
    %1306 = vmatpush1.bf16.msra.mxu0 0
    %1307 = vmatprep.mubr.bf16.mxu0 0
    %1308 = vmatmul.mubr.bf16.gmra.mrb[0].mxu0 %v552
    %v1309 = vpop.f32.mrb[0].mxu0
    %v1310 = vadd.f32 %v558, %v1309
    %v1311 = vpop.f32.mrb[0].mxu0
    %v1312 = vadd.f32 %v562, %v1311
    %v1313 = vpop.f32.mrb[0].mxu0
    %v1314 = vpop.f32.mrb[0].mxu0
    %1315 = vdwg.mxu0
    %1316 = vmatprep.subr.bf16.mxu0 %v1022
    %1317 = vmatpush1.bf16.msra.mxu0 %v1021
    %1318 = vmatprep.subr.bf16.mxu0 %v1038
    %1319 = vmatpush1.bf16.msra.mxu0 %v1037
    %1320 = vmatprep.subr.bf16.mxu0 %v1054
    %1321 = vmatpush1.bf16.msra.mxu0 %v1053
    %1322 = vmatprep.subr.bf16.mxu0 %v1070
    %1323 = vmatpush1.bf16.msra.mxu0 %v1069
    %1324 = vmatprep.subr.bf16.mxu0 %v1086
    %1325 = vmatpush1.bf16.msra.mxu0 %v1085
    %1326 = vmatprep.subr.bf16.mxu0 %v1102
    %1327 = vmatpush1.bf16.msra.mxu0 %v1101
    %1328 = vmatprep.subr.bf16.mxu0 %v1118
    %1329 = vmatpush1.bf16.msra.mxu0 %v1117
    %1330 = vmatprep.subr.bf16.mxu0 %v1134
    %1331 = vmatpush1.bf16.msra.mxu0 %v1133
    %1332 = vmatprep.subr.bf16.mxu0 0
    %1333 = vmatpush1.bf16.msra.mxu0 0
    %1334 = vmatprep.subr.bf16.mxu0 0
    %1335 = vmatpush1.bf16.msra.mxu0 0
    %1336 = vmatprep.subr.bf16.mxu0 0
    %1337 = vmatpush1.bf16.msra.mxu0 0
    %1338 = vmatprep.subr.bf16.mxu0 0
    %1339 = vmatpush1.bf16.msra.mxu0 0
    %1340 = vmatprep.subr.bf16.mxu0 0
    %1341 = vmatpush1.bf16.msra.mxu0 0
    %1342 = vmatprep.subr.bf16.mxu0 0
    %1343 = vmatpush1.bf16.msra.mxu0 0
    %1344 = vmatprep.subr.bf16.mxu0 0
    %1345 = vmatpush1.bf16.msra.mxu0 0
    %1346 = vmatprep.subr.bf16.mxu0 0
    %1347 = vmatpush1.bf16.msra.mxu0 0
    %1348 = vmatprep.mubr.bf16.mxu0 0
    %1349 = vmatmul.mubr.bf16.gmra.mrb[0].mxu0 %v552
    %v1350 = vpop.f32.mrb[0].mxu0
    %v1351 = vadd.f32 %v566, %v1350
    %v1352 = vpop.f32.mrb[0].mxu0
    %v1353 = vadd.f32 %v570, %v1352
    %v1354 = vpop.f32.mrb[0].mxu0
    %v1355 = vpop.f32.mrb[0].mxu0
    %1356 = vdwg.mxu0
    %1357 = vmatprep.subr.bf16.mxu0 %v1024
    %1358 = vmatpush1.bf16.msra.mxu0 %v1023
    %1359 = vmatprep.subr.bf16.mxu0 %v1040
    %1360 = vmatpush1.bf16.msra.mxu0 %v1039
    %1361 = vmatprep.subr.bf16.mxu0 %v1056
    %1362 = vmatpush1.bf16.msra.mxu0 %v1055
    %1363 = vmatprep.subr.bf16.mxu0 %v1072
    %1364 = vmatpush1.bf16.msra.mxu0 %v1071
    %1365 = vmatprep.subr.bf16.mxu0 %v1088
    %1366 = vmatpush1.bf16.msra.mxu0 %v1087
    %1367 = vmatprep.subr.bf16.mxu0 %v1104
    %1368 = vmatpush1.bf16.msra.mxu0 %v1103
    %1369 = vmatprep.subr.bf16.mxu0 %v1120
    %1370 = vmatpush1.bf16.msra.mxu0 %v1119
    %1371 = vmatprep.subr.bf16.mxu0 %v1136
    %1372 = vmatpush1.bf16.msra.mxu0 %v1135
    %1373 = vmatprep.subr.bf16.mxu0 0
    %1374 = vmatpush1.bf16.msra.mxu0 0
    %1375 = vmatprep.subr.bf16.mxu0 0
    %1376 = vmatpush1.bf16.msra.mxu0 0
    %1377 = vmatprep.subr.bf16.mxu0 0
    %1378 = vmatpush1.bf16.msra.mxu0 0
    %1379 = vmatprep.subr.bf16.mxu0 0
    %1380 = vmatpush1.bf16.msra.mxu0 0
    %1381 = vmatprep.subr.bf16.mxu0 0
    %1382 = vmatpush1.bf16.msra.mxu0 0
    %1383 = vmatprep.subr.bf16.mxu0 0
    %1384 = vmatpush1.bf16.msra.mxu0 0
    %1385 = vmatprep.subr.bf16.mxu0 0
    %1386 = vmatpush1.bf16.msra.mxu0 0
    %1387 = vmatprep.subr.bf16.mxu0 0
    %1388 = vmatpush1.bf16.msra.mxu0 0
    %1389 = vmatprep.mubr.bf16.mxu0 0
    %1390 = vmatmul.mubr.bf16.gmra.mrb[0].mxu0 %v552
    %v1391 = vpop.f32.mrb[0].mxu0
    %v1392 = vadd.f32 %v574, %v1391
    %v1393 = vpop.f32.mrb[0].mxu0
    %v1394 = vadd.f32 %v578, %v1393
    %v1395 = vpop.f32.mrb[0].mxu0
    %v1396 = vpop.f32.mrb[0].mxu0
    %1397 = vdwg.mxu0
    %1398 = vmatprep.subr.bf16.mxu0 %v1026
    %1399 = vmatpush1.bf16.msra.mxu0 %v1025
    %1400 = vmatprep.subr.bf16.mxu0 %v1042
    %1401 = vmatpush1.bf16.msra.mxu0 %v1041
    %1402 = vmatprep.subr.bf16.mxu0 %v1058
    %1403 = vmatpush1.bf16.msra.mxu0 %v1057
    %1404 = vmatprep.subr.bf16.mxu0 %v1074
    %1405 = vmatpush1.bf16.msra.mxu0 %v1073
    %1406 = vmatprep.subr.bf16.mxu0 %v1090
    %1407 = vmatpush1.bf16.msra.mxu0 %v1089
    %1408 = vmatprep.subr.bf16.mxu0 %v1106
    %1409 = vmatpush1.bf16.msra.mxu0 %v1105
    %1410 = vmatprep.subr.bf16.mxu0 %v1122
    %1411 = vmatpush1.bf16.msra.mxu0 %v1121
    %1412 = vmatprep.subr.bf16.mxu0 %v1138
    %1413 = vmatpush1.bf16.msra.mxu0 %v1137
    %1414 = vmatprep.subr.bf16.mxu0 0
    %1415 = vmatpush1.bf16.msra.mxu0 0
    %1416 = vmatprep.subr.bf16.mxu0 0
    %1417 = vmatpush1.bf16.msra.mxu0 0
    %1418 = vmatprep.subr.bf16.mxu0 0
    %1419 = vmatpush1.bf16.msra.mxu0 0
    %1420 = vmatprep.subr.bf16.mxu0 0
    %1421 = vmatpush1.bf16.msra.mxu0 0
    %1422 = vmatprep.subr.bf16.mxu0 0
    %1423 = vmatpush1.bf16.msra.mxu0 0
    %1424 = vmatprep.subr.bf16.mxu0 0
    %1425 = vmatpush1.bf16.msra.mxu0 0
    %1426 = vmatprep.subr.bf16.mxu0 0
    %1427 = vmatpush1.bf16.msra.mxu0 0
    %1428 = vmatprep.subr.bf16.mxu0 0
    %1429 = vmatpush1.bf16.msra.mxu0 0
    %1430 = vmatprep.mubr.bf16.mxu0 0
    %1431 = vmatmul.mubr.bf16.gmra.mrb[0].mxu0 %v552
    %v1432 = vpop.f32.mrb[0].mxu0
    %v1433 = vadd.f32 %v582, %v1432
    %v1434 = vpop.f32.mrb[0].mxu0
    %v1435 = vadd.f32 %v586, %v1434
    %v1436 = vpop.f32.mrb[0].mxu0
    %v1437 = vpop.f32.mrb[0].mxu0
    %1438 = vdwg.mxu0
    %1439 = vmatprep.subr.bf16.mxu0 %v1028
    %1440 = vmatpush1.bf16.msra.mxu0 %v1027
    %1441 = vmatprep.subr.bf16.mxu0 %v1044
    %1442 = vmatpush1.bf16.msra.mxu0 %v1043
    %1443 = vmatprep.subr.bf16.mxu0 %v1060
    %1444 = vmatpush1.bf16.msra.mxu0 %v1059
    %1445 = vmatprep.subr.bf16.mxu0 %v1076
    %1446 = vmatpush1.bf16.msra.mxu0 %v1075
    %1447 = vmatprep.subr.bf16.mxu0 %v1092
    %1448 = vmatpush1.bf16.msra.mxu0 %v1091
    %1449 = vmatprep.subr.bf16.mxu0 %v1108
    %1450 = vmatpush1.bf16.msra.mxu0 %v1107
    %1451 = vmatprep.subr.bf16.mxu0 %v1124
    %1452 = vmatpush1.bf16.msra.mxu0 %v1123
    %1453 = vmatprep.subr.bf16.mxu0 %v1140
    %1454 = vmatpush1.bf16.msra.mxu0 %v1139
    %1455 = vmatprep.subr.bf16.mxu0 0
    %1456 = vmatpush1.bf16.msra.mxu0 0
    %1457 = vmatprep.subr.bf16.mxu0 0
    %1458 = vmatpush1.bf16.msra.mxu0 0
    %1459 = vmatprep.subr.bf16.mxu0 0
    %1460 = vmatpush1.bf16.msra.mxu0 0
    %1461 = vmatprep.subr.bf16.mxu0 0
    %1462 = vmatpush1.bf16.msra.mxu0 0
    %1463 = vmatprep.subr.bf16.mxu0 0
    %1464 = vmatpush1.bf16.msra.mxu0 0
    %1465 = vmatprep.subr.bf16.mxu0 0
    %1466 = vmatpush1.bf16.msra.mxu0 0
    %1467 = vmatprep.subr.bf16.mxu0 0
    %1468 = vmatpush1.bf16.msra.mxu0 0
    %1469 = vmatprep.subr.bf16.mxu0 0
    %1470 = vmatpush1.bf16.msra.mxu0 0
    %1471 = vmatprep.mubr.bf16.mxu0 0
    %1472 = vmatmul.mubr.bf16.gmra.mrb[0].mxu0 %v552
    %v1473 = vpop.f32.mrb[0].mxu0
    %v1474 = vadd.f32 %v590, %v1473
    %v1475 = vpop.f32.mrb[0].mxu0
    %v1476 = vadd.f32 %v594, %v1475
    %v1477 = vpop.f32.mrb[0].mxu0
    %v1478 = vpop.f32.mrb[0].mxu0
    %1479 = vdwg.mxu0
    %1480 = vmatprep.subr.bf16.mxu0 %v1030
    %1481 = vmatpush1.bf16.msra.mxu0 %v1029
    %1482 = vmatprep.subr.bf16.mxu0 %v1046
    %1483 = vmatpush1.bf16.msra.mxu0 %v1045
    %1484 = vmatprep.subr.bf16.mxu0 %v1062
    %1485 = vmatpush1.bf16.msra.mxu0 %v1061
    %1486 = vmatprep.subr.bf16.mxu0 %v1078
    %1487 = vmatpush1.bf16.msra.mxu0 %v1077
    %1488 = vmatprep.subr.bf16.mxu0 %v1094
    %1489 = vmatpush1.bf16.msra.mxu0 %v1093
    %1490 = vmatprep.subr.bf16.mxu0 %v1110
    %1491 = vmatpush1.bf16.msra.mxu0 %v1109
    %1492 = vmatprep.subr.bf16.mxu0 %v1126
    %1493 = vmatpush1.bf16.msra.mxu0 %v1125
    %1494 = vmatprep.subr.bf16.mxu0 %v1142
    %1495 = vmatpush1.bf16.msra.mxu0 %v1141
    %1496 = vmatprep.subr.bf16.mxu0 0
    %1497 = vmatpush1.bf16.msra.mxu0 0
    %1498 = vmatprep.subr.bf16.mxu0 0
    %1499 = vmatpush1.bf16.msra.mxu0 0
    %1500 = vmatprep.subr.bf16.mxu0 0
    %1501 = vmatpush1.bf16.msra.mxu0 0
    %1502 = vmatprep.subr.bf16.mxu0 0
    %1503 = vmatpush1.bf16.msra.mxu0 0
    %1504 = vmatprep.subr.bf16.mxu0 0
    %1505 = vmatpush1.bf16.msra.mxu0 0
    %1506 = vmatprep.subr.bf16.mxu0 0
    %1507 = vmatpush1.bf16.msra.mxu0 0
    %1508 = vmatprep.subr.bf16.mxu0 0
    %1509 = vmatpush1.bf16.msra.mxu0 0
    %1510 = vmatprep.subr.bf16.mxu0 0
    %1511 = vmatpush1.bf16.msra.mxu0 0
    %1512 = vmatprep.mubr.bf16.mxu0 0
    %1513 = vmatmul.mubr.bf16.gmra.mrb[0].mxu0 %v552
    %v1514 = vpop.f32.mrb[0].mxu0
    %v1515 = vadd.f32 %v598, %v1514
    %v1516 = vpop.f32.mrb[0].mxu0
    %v1517 = vadd.f32 %v602, %v1516
    %v1518 = vpop.f32.mrb[0].mxu0
    %v1519 = vpop.f32.mrb[0].mxu0
    %1520 = vdwg.mxu0
    %1521 = vmatprep.subr.bf16.mxu0 %v1032
    %1522 = vmatpush1.bf16.msra.mxu0 %v1031
    %1523 = vmatprep.subr.bf16.mxu0 %v1048
    %1524 = vmatpush1.bf16.msra.mxu0 %v1047
    %1525 = vmatprep.subr.bf16.mxu0 %v1064
    %1526 = vmatpush1.bf16.msra.mxu0 %v1063
    %1527 = vmatprep.subr.bf16.mxu0 %v1080
    %1528 = vmatpush1.bf16.msra.mxu0 %v1079
    %1529 = vmatprep.subr.bf16.mxu0 %v1096
    %1530 = vmatpush1.bf16.msra.mxu0 %v1095
    %1531 = vmatprep.subr.bf16.mxu0 %v1112
    %1532 = vmatpush1.bf16.msra.mxu0 %v1111
    %1533 = vmatprep.subr.bf16.mxu0 %v1128
    %1534 = vmatpush1.bf16.msra.mxu0 %v1127
    %1535 = vmatprep.subr.bf16.mxu0 %v1144
    %1536 = vmatpush1.bf16.msra.mxu0 %v1143
    %1537 = vmatprep.subr.bf16.mxu0 0
    %1538 = vmatpush1.bf16.msra.mxu0 0
    %1539 = vmatprep.subr.bf16.mxu0 0
    %1540 = vmatpush1.bf16.msra.mxu0 0
    %1541 = vmatprep.subr.bf16.mxu0 0
    %1542 = vmatpush1.bf16.msra.mxu0 0
    %1543 = vmatprep.subr.bf16.mxu0 0
    %1544 = vmatpush1.bf16.msra.mxu0 0
    %1545 = vmatprep.subr.bf16.mxu0 0
    %1546 = vmatpush1.bf16.msra.mxu0 0
    %1547 = vmatprep.subr.bf16.mxu0 0
    %1548 = vmatpush1.bf16.msra.mxu0 0
    %1549 = vmatprep.subr.bf16.mxu0 0
    %1550 = vmatpush1.bf16.msra.mxu0 0
    %1551 = vmatprep.subr.bf16.mxu0 0
    %1552 = vmatpush1.bf16.msra.mxu0 0
    %1553 = vmatprep.mubr.bf16.mxu0 0
    %1554 = vmatmul.mubr.bf16.gmra.mrb[0].mxu0 %v552
    %v1555 = vpop.f32.mrb[0].mxu0
    %v1556 = vadd.f32 %v606, %v1555
    %v1557 = vpop.f32.mrb[0].mxu0
    %v1558 = vadd.f32 %v610, %v1557
    %v1559 = vpop.f32.mrb[0].mxu0
    %v1560 = vpop.f32.mrb[0].mxu0
    %1561 = vdwg.mxu0
    %1562 = vmatprep.subr.bf16.mxu0 %v1034
    %1563 = vmatpush1.bf16.msra.mxu0 %v1033
    %1564 = vmatprep.subr.bf16.mxu0 %v1050
    %1565 = vmatpush1.bf16.msra.mxu0 %v1049
    %1566 = vmatprep.subr.bf16.mxu0 %v1066
    %1567 = vmatpush1.bf16.msra.mxu0 %v1065
    %1568 = vmatprep.subr.bf16.mxu0 %v1082
    %1569 = vmatpush1.bf16.msra.mxu0 %v1081
    %1570 = vmatprep.subr.bf16.mxu0 %v1098
    %1571 = vmatpush1.bf16.msra.mxu0 %v1097
    %1572 = vmatprep.subr.bf16.mxu0 %v1114
    %1573 = vmatpush1.bf16.msra.mxu0 %v1113
    %1574 = vmatprep.subr.bf16.mxu0 %v1130
    %1575 = vmatpush1.bf16.msra.mxu0 %v1129
    %1576 = vmatprep.subr.bf16.mxu0 %v1146
    %1577 = vmatpush1.bf16.msra.mxu0 %v1145
    %1578 = vmatprep.subr.bf16.mxu0 0
    %1579 = vmatpush1.bf16.msra.mxu0 0
    %1580 = vmatprep.subr.bf16.mxu0 0
    %1581 = vmatpush1.bf16.msra.mxu0 0
    %1582 = vmatprep.subr.bf16.mxu0 0
    %1583 = vmatpush1.bf16.msra.mxu0 0
    %1584 = vmatprep.subr.bf16.mxu0 0
    %1585 = vmatpush1.bf16.msra.mxu0 0
    %1586 = vmatprep.subr.bf16.mxu0 0
    %1587 = vmatpush1.bf16.msra.mxu0 0
    %1588 = vmatprep.subr.bf16.mxu0 0
    %1589 = vmatpush1.bf16.msra.mxu0 0
    %1590 = vmatprep.subr.bf16.mxu0 0
    %1591 = vmatpush1.bf16.msra.mxu0 0
    %1592 = vmatprep.subr.bf16.mxu0 0
    %1593 = vmatpush1.bf16.msra.mxu0 0
    %1594 = vmatprep.mubr.bf16.mxu0 0
    %1595 = vmatmul.mubr.bf16.gmra.mrb[0].mxu0 %v552
    %v1596 = vpop.f32.mrb[0].mxu0
    %v1597 = vadd.f32 %v614, %v1596
    %v1598 = vpop.f32.mrb[0].mxu0
    %v1599 = vadd.f32 %v618, %v1598
    %v1600 = vpop.f32.mrb[0].mxu0
    %v1601 = vpop.f32.mrb[0].mxu0
    %1602 = vdwg.mxu0
    %v1603 = vmax.f32 %v1310, 0.0
    %v1604 = vmax.f32 %v1312, 0.0
    %v1605 = vmax.f32 %v1351, 0.0
    %v1606 = vmax.f32 %v1353, 0.0
    %v1607 = vmax.f32 %v1392, 0.0
    %v1608 = vmax.f32 %v1394, 0.0
    %v1609 = vmax.f32 %v1433, 0.0
    %v1610 = vmax.f32 %v1435, 0.0
    %v1611 = vmax.f32 %v1474, 0.0
    %v1612 = vmax.f32 %v1476, 0.0
    %v1613 = vmax.f32 %v1515, 0.0
    %v1614 = vmax.f32 %v1517, 0.0
    %v1615 = vmax.f32 %v1556, 0.0
    %v1616 = vmax.f32 %v1558, 0.0
    %v1617 = vmax.f32 %v1597, 0.0
    %v1618 = vmax.f32 %v1599, 0.0
    %1619 = vst [vmem:[#allocation13] sm:$0xff] %v1603
    %1620 = vst [vmem:[#allocation13 + $0x8] sm:$0xff] %v1604
    %1621 = vst [vmem:[#allocation13 + $0x10] sm:$0xff] %v1605
    %1622 = vst [vmem:[#allocation13 + $0x18] sm:$0xff] %v1606
    %1623 = vst [vmem:[#allocation13 + $0x20] sm:$0xff] %v1607
    %1624 = vst [vmem:[#allocation13 + $0x28] sm:$0xff] %v1608
    %1625 = vst [vmem:[#allocation13 + $0x30] sm:$0xff] %v1609
    %1626 = vst [vmem:[#allocation13 + $0x38] sm:$0xff] %v1610
    %1627 = vst [vmem:[#allocation13 + $0x40] sm:$0xff] %v1611
    %1628 = vst [vmem:[#allocation13 + $0x48] sm:$0xff] %v1612
    %1629 = vst [vmem:[#allocation13 + $0x50] sm:$0xff] %v1613
    %1630 = vst [vmem:[#allocation13 + $0x58] sm:$0xff] %v1614
    %1631 = vst [vmem:[#allocation13 + $0x60] sm:$0xff] %v1615
    %1632 = vst [vmem:[#allocation13 + $0x68] sm:$0xff] %v1616
    %1633 = vst [vmem:[#allocation13 + $0x70] sm:$0xff] %v1617
    %1634 = vst [vmem:[#allocation13 + $0x78] sm:$0xff] %v1618
    // Predicated region
    $region66: #{tpu_custom_call.1} parent=1 // pred_check
      _
    $region67: #{tpu_custom_call.1} parent=1 // pred_check_branch
      %1636 = sbr.rel (0) target = $region69
    $region68: #{tpu_custom_call.1} parent=1 // pred_region
      %s1638 = ssub.s32 2048, 2048
      %1639 = vsyncadd [#allocation4], %s1638
      %s1641 = sshll.u32 [#allocation13], 4
      %s1642 = int_to_ptr.vmem [resolvable:$true] %s1641
      %1644 = dma.vmem_to_hbm [thread:$0]  %s1642, 2048, %s10, [#allocation4]
    $region69: #{tpu_custom_call.1} parent=1 // pred_fallthru
      _
    // Predicated region
    $region70: #{tpu_custom_call.1} parent=1 // pred_check
      _
    $region71: #{tpu_custom_call.1} parent=1 // pred_check_branch
      %1646 = sbr.rel (0) target = $region73
    $region72: #{tpu_custom_call.1} parent=1 // pred_region
      %1647 = dma.done [#allocation4], 2048
    $region73: #{tpu_custom_call.1} parent=1 // pred_fallthru
      _
    %1648 = vsyncpa [#allocation3], 1
    %1649 = vsyncpa [#allocation6], 1
    %1650 = vsyncpa [#allocation9], 1
    %1651 = vsyncpa [#allocation12], 1
    %1652 = vsyncpa [#allocation4], 1

</llo_original>
